<compile_context>
chip_gen: v7x
topology: tpu7x:2x2x1
jax: 0.10.0
libtpu: 0.0.40
codegen_flags: <defaults>
</compile_context>

<pallas_src>
import functools

import jax
import jax.numpy as jnp
from jax import lax
from jax.experimental import pallas as pl
from jax.experimental.pallas import tpu as pltpu

IN_FEATURES = 48
HIDDEN = 512
N_ACTIONS = 6      # typical Atari action-space size (env.single_action_space.n)
LANE = 128         # TPU lane width; output lanes are padded to a multiple of this
_MAX_BATCH_TILE = 1024  # keeps f32 intermediates ~8 MiB: under default scoped VMEM everywhere


def _round_up(x, m):
    return ((x + m - 1) // m) * m


# --------------------------------------------------------------------------------------
# Kernels
# --------------------------------------------------------------------------------------
def _qnet_kernel(x_ref, w1_ref, b1_ref, w2_ref, b2_ref, w3_ref, b3_ref, o_ref):
    # In-kernel observation cast (uint8 / f32 / bf16 accepted); 1/255 is pre-folded into w1.
    x = x_ref[...].astype(jnp.float32).astype(w1_ref.dtype)

    h1 = jnp.dot(x, w1_ref[...], preferred_element_type=jnp.float32) + b1_ref[...]
    h1 = jnp.maximum(h1, 0.0).astype(w2_ref.dtype)   # bf16 feed to the next MXU matmul

    h2 = jnp.dot(h1, w2_ref[...], preferred_element_type=jnp.float32) + b2_ref[...]
    h2 = jnp.maximum(h2, 0.0).astype(w3_ref.dtype)

    out = jnp.dot(h2, w3_ref[...], preferred_element_type=jnp.float32) + b3_ref[...]
    o_ref[...] = out.astype(o_ref.dtype)


def _qnet_argmax_kernel(n_actions, x_ref, w1_ref, b1_ref, w2_ref, b2_ref, w3_ref, b3_ref,
                        a_ref):
    # Same fused forward pass, but the padded-lane masking + argmax happen in-kernel so only
    # a 4-byte action per row is written back (instead of a 128-lane Q-value slab).
    x = x_ref[...].astype(jnp.float32).astype(w1_ref.dtype)
    h1 = jnp.dot(x, w1_ref[...], preferred_element_type=jnp.float32) + b1_ref[...]
    h1 = jnp.maximum(h1, 0.0).astype(w2_ref.dtype)
    h2 = jnp.dot(h1, w2_ref[...], preferred_element_type=jnp.float32) + b2_ref[...]
    h2 = jnp.maximum(h2, 0.0).astype(w3_ref.dtype)
    q = jnp.dot(h2, w3_ref[...], preferred_element_type=jnp.float32) + b3_ref[...]

    lane = lax.broadcasted_iota(jnp.int32, q.shape, 1)
    q = jnp.where(lane < n_actions, q, -jnp.inf)          # ignore zero-padded lanes
    qmax = jnp.max(q, axis=-1, keepdims=True)
    # First lane attaining the row max (matches torch.argmax tie-breaking).
    cand = jnp.where(q == qmax, lane, q.shape[-1])
    a_ref[...] = jnp.min(cand, axis=-1, keepdims=True).astype(jnp.int32)


# --------------------------------------------------------------------------------------
# Spec / tiling helpers
# --------------------------------------------------------------------------------------
def _resident_spec(shape, single_buffer):
    """BlockSpec for a parameter that stays resident across the batch grid.

    The constant index_map means the block never changes, so double-buffering it is pure
    VMEM waste (~0.7 MB, mostly the bf16 w2).  Use pl.Buffered(1) when this jax build
    supports BlockSpec(pipeline_mode=...); otherwise fall back to the default.
    """
    index_map = lambda i: (0, 0)
    if single_buffer and hasattr(pl, "Buffered"):
        try:
            return pl.BlockSpec(shape, index_map, pipeline_mode=pl.Buffered(1))
        except TypeError:   # older jax: BlockSpec has no pipeline_mode kwarg
            pass
    return pl.BlockSpec(shape, index_map)


def _in_specs(batch_tile, in_f, hidden, n_pad, single_buffer):
    return [
        pl.BlockSpec((batch_tile, in_f), lambda i: (i, 0)),          # batch-tiled activations
        _resident_spec((in_f, hidden), single_buffer),               # w1 (1/255 folded in)
        _resident_spec((1, hidden), single_buffer),                  # b1
        _resident_spec((hidden, hidden), single_buffer),             # w2
        _resident_spec((1, hidden), single_buffer),                  # b2
        _resident_spec((hidden, n_pad), single_buffer),              # w3 (lane-padded)
        _resident_spec((1, n_pad), single_buffer),                   # b3 (lane-padded)
    ]


def _pick_batch_tile(B, batch_tile):
    if batch_tile is not None:
        return min(batch_tile, B)
    if B <= 512:
        return B   # one grid step: single weight DMA, full MXU row usage
    # Few big balanced 256-aligned tiles: exactly two equal steps up to B=2048 (shards
    # cleanly across v7x's two TensorCores), far fewer steps than 256-row tiles elsewhere.
    # 256-multiples also satisfy bf16 (16) and uint8 (32) sublane packing.
    return min(_round_up(pl.cdiv(B, 2), 256), _MAX_BATCH_TILE)


def _compiler_params(batch_tile, in_f, hidden, n_pad, x_itemsize, w_itemsize, out_itemsize,
                     single_buffer):
    # Right-size the scoped-VMEM request: estimate the real footprint and only raise the
    # limit when it actually exceeds the smallest default (16 MiB on v5e, 32 MiB v6e/v7x).
    param_copies = 1 if single_buffer else 2
    param_bytes = param_copies * (
        (in_f * hidden + hidden * hidden + hidden * n_pad) * w_itemsize
        + (2 * hidden + n_pad) * 4)
    io_bytes = 2 * batch_tile * (in_f * x_itemsize + n_pad * out_itemsize)  # double-buffered x/out
    inter_bytes = 2 * batch_tile * hidden * (4 + w_itemsize)                # f32 h1/h2 + low-prec feeds
    est = param_bytes + io_bytes + inter_bytes
    kwargs = {}
    if est > 12 * 1024 * 1024:   # only for explicit oversized batch_tile overrides
        kwargs["vmem_limit_bytes"] = int(min(2 * est, 48 * 1024 * 1024))
    return pltpu.CompilerParams(dimension_semantics=("parallel",), **kwargs)


def _cost_estimate(B, in_f, hidden, n_pad, x, params, out_bytes_per_row):
    flops = 2 * B * (in_f * hidden + hidden * hidden + hidden * n_pad)
    bytes_accessed = int(x.size) * x.dtype.itemsize
    bytes_accessed += sum(int(p.size) * p.dtype.itemsize for p in params)
    bytes_accessed += B * out_bytes_per_row
    return pl.CostEstimate(flops=flops, transcendentals=0, bytes_accessed=bytes_accessed)


# --------------------------------------------------------------------------------------
# Parameter preparation (one-time; do NOT call per forward pass)
# --------------------------------------------------------------------------------------
def prepare_params(w1, b1, w2, b2, w3, b3, *, param_dtype=jnp.bfloat16):
    """Folds 1/255 into w1, casts weights to `param_dtype` (bf16 default), zero-pads w3/b3
    lanes to a multiple of 128 so the kernel output is lane-dense.  Returns (params, n_actions)."""
    n_actions = w3.shape[1]
    n_pad = max(LANE, _round_up(n_actions, LANE))

    w1p = (jnp.asarray(w1, jnp.float32) * (1.0 / 255.0)).astype(param_dtype)
    w2p = jnp.asarray(w2, jnp.float32).astype(param_dtype)
    w3p = jnp.zeros((w3.shape[0], n_pad), param_dtype)
    w3p = w3p.at[:, :n_actions].set(jnp.asarray(w3, jnp.float32).astype(param_dtype))

    b1p = jnp.asarray(b1, jnp.float32).reshape(1, -1)
    b2p = jnp.asarray(b2, jnp.float32).reshape(1, -1)
    b3p = jnp.zeros((1, n_pad), jnp.float32)
    b3p = b3p.at[:, :n_actions].set(jnp.asarray(b3, jnp.float32).reshape(1, -1))

    return (w1p, b1p, w2p, b2p, w3p, b3p), n_actions


# --------------------------------------------------------------------------------------
# Public entry points
# --------------------------------------------------------------------------------------
@functools.partial(jax.jit,
                   static_argnames=("n_actions", "batch_tile", "out_dtype", "single_buffer_params"))
def qnetwork_forward(x, params, *, n_actions, batch_tile=None, out_dtype=None,
                     single_buffer_params=True):
    """Q-values for a batch of observations.  x: (B, 48), uint8/f32/bf16."""
    w1, b1, w2, b2, w3, b3 = params
    B, in_f = x.shape
    hidden = w1.shape[1]
    n_pad = w3.shape[1]
    if out_dtype is None:
        out_dtype = w1.dtype   # bf16 Q-values on the bf16 fast path: halves output writeback
    out_itemsize = jnp.dtype(out_dtype).itemsize
    tile = _pick_batch_tile(B, batch_tile)

    out_padded = pl.pallas_call(
        _qnet_kernel,
        out_shape=jax.ShapeDtypeStruct((B, n_pad), out_dtype),
        grid_spec=pltpu.PrefetchScalarGridSpec(
            num_scalar_prefetch=0,
            grid=(pl.cdiv(B, tile),),
            in_specs=_in_specs(tile, in_f, hidden, n_pad, single_buffer_params),
            out_specs=pl.BlockSpec((tile, n_pad), lambda i: (i, 0)),
        ),
        compiler_params=_compiler_params(tile, in_f, hidden, n_pad, x.dtype.itemsize,
                                         w1.dtype.itemsize, out_itemsize, single_buffer_params),
        cost_estimate=_cost_estimate(B, in_f, hidden, n_pad, x, params, n_pad * out_itemsize),
    )(x, w1, b1, w2, b2, w3, b3)

    # Drop zero-padded lanes (cheap fused slice).
    return out_padded[:, :n_actions]


@functools.partial(jax.jit,
                   static_argnames=("n_actions", "batch_tile", "single_buffer_params"))
def qnetwork_greedy_action(x, params, *, n_actions, batch_tile=None, single_buffer_params=True):
    """argmax_a Q(x, a), fused into the kernel -> (B,) int32 actions."""
    w1, b1, w2, b2, w3, b3 = params
    B, in_f = x.shape
    hidden = w1.shape[1]
    n_pad = w3.shape[1]
    tile = _pick_batch_tile(B, batch_tile)

    actions = pl.pallas_call(
        functools.partial(_qnet_argmax_kernel, n_actions),
        out_shape=jax.ShapeDtypeStruct((B, 1), jnp.int32),
        grid_spec=pltpu.PrefetchScalarGridSpec(
            num_scalar_prefetch=0,
            grid=(pl.cdiv(B, tile),),
            in_specs=_in_specs(tile, in_f, hidden, n_pad, single_buffer_params),
            out_specs=pl.BlockSpec((tile, 1), lambda i: (i, 0)),
        ),
        compiler_params=_compiler_params(tile, in_f, hidden, n_pad, x.dtype.itemsize,
                                         w1.dtype.itemsize, 4, single_buffer_params),
        cost_estimate=_cost_estimate(B, in_f, hidden, n_pad, x, params, 4),
    )(x, w1, b1, w2, b2, w3, b3)
    return actions[:, 0]


def init_params(key):
    """PyTorch nn.Linear default init: U(-1/sqrt(fan_in), 1/sqrt(fan_in))."""
    ks = jax.random.split(key, 6)

    def linear(kw, kb, fan_in, fan_out):
        bound = 1.0 / jnp.sqrt(jnp.float32(fan_in))
        w = jax.random.uniform(kw, (fan_in, fan_out), jnp.float32, -bound, bound)
        b = jax.random.uniform(kb, (1, fan_out), jnp.float32, -bound, bound)
        return w, b

    w1, b1 = linear(ks[0], ks[1], IN_FEATURES, HIDDEN)
    w2, b2 = linear(ks[2], ks[3], HIDDEN, HIDDEN)
    w3, b3 = linear(ks[4], ks[5], HIDDEN, N_ACTIONS)
    return w1, b1, w2, b2, w3, b3


if __name__ == "__main__":
    key = jax.random.PRNGKey(0)
    k_params, k_x, k_x2 = jax.random.split(key, 3)
    w1, b1, w2, b2, w3, b3 = init_params(k_params)

    def reference(xf):   # exact-math f32 reference of the PyTorch module
        xs = xf / 255.0
        h = jnp.maximum(xs @ w1 + b1, 0.0)
        h = jnp.maximum(h @ w2 + b2, 0.0)
        return h @ w3 + b3

    B = 8
    x = jax.random.uniform(k_x, (B, IN_FEATURES), jnp.float32, 0.0, 255.0)
    ref = reference(x)

    params_bf16, n_act = prepare_params(w1, b1, w2, b2, w3, b3, param_dtype=jnp.bfloat16)
    params_f32, _ = prepare_params(w1, b1, w2, b2, w3, b3, param_dtype=jnp.float32)

    # Probe whether this jax/Mosaic build accepts single-buffered resident params
    # (pl.Buffered(1)); fall back to default double-buffering if not.
    single_buffer = True
    try:
        out_bf16 = jax.block_until_ready(
            qnetwork_forward(x, params_bf16, n_actions=n_act, single_buffer_params=True))
    except Exception:
        single_buffer = False
        out_bf16 = jax.block_until_ready(
            qnetwork_forward(x, params_bf16, n_actions=n_act, single_buffer_params=False))

    # 1) bf16 fast path (default): bf16 weights + bf16 Q-values.
    assert out_bf16.shape == (B, N_ACTIONS)
    assert jnp.allclose(out_bf16.astype(jnp.float32), ref, atol=5e-2, rtol=5e-2)

    # 2) f32 parameter path: tight numerical check of the fused kernel semantics.
    out_f32 = jax.block_until_ready(
        qnetwork_forward(x, params_f32, n_actions=n_act, single_buffer_params=single_buffer))
    assert out_f32.shape == (B, N_ACTIONS) and out_f32.dtype == jnp.float32
    assert jnp.allclose(out_f32, ref, atol=1e-3, rtol=1e-3)

    # 3) Ragged batch / multi-step grid: B not a multiple of batch_tile (masked last tile).
    B2 = 40
    x2 = jax.random.uniform(k_x2, (B2, IN_FEATURES), jnp.float32, 0.0, 255.0)
    ref2 = reference(x2)
    out2 = jax.block_until_ready(
        qnetwork_forward(x2, params_bf16, n_actions=n_act, batch_tile=16,
                         single_buffer_params=single_buffer))
    assert out2.shape == (B2, N_ACTIONS)
    assert jnp.allclose(out2.astype(jnp.float32), ref2, atol=5e-2, rtol=5e-2)

    # 4) Fused greedy-action (argmax) path.
    acts = jax.block_until_ready(
        qnetwork_greedy_action(x, params_f32, n_actions=n_act,
                               single_buffer_params=single_buffer))
    assert acts.shape == (B,) and acts.dtype == jnp.int32
    picked = ref[jnp.arange(B), acts]
    assert bool(jnp.all(picked >= ref.max(axis=-1) - 1e-3))

    print("KERNEL_OK")
</pallas_src>

<mosaic_0001>
module attributes {stable_mosaic.version = 11 : i64} {
  func.func @_qnet_kernel(%arg0: i32, %arg1: memref<8x48xf32, #tpu.memory_space<vmem>>, %arg2: memref<48x512xbf16, #tpu.memory_space<vmem>>, %arg3: memref<1x512xf32, #tpu.memory_space<vmem>>, %arg4: memref<512x512xbf16, #tpu.memory_space<vmem>>, %arg5: memref<1x512xf32, #tpu.memory_space<vmem>>, %arg6: memref<512x128xbf16, #tpu.memory_space<vmem>>, %arg7: memref<1x128xf32, #tpu.memory_space<vmem>>, %arg8: memref<8x128xbf16, #tpu.memory_space<vmem>>) attributes {dimension_semantics = [#tpu.dimension_semantics<parallel>], iteration_bounds = array<i64: 1>, scalar_prefetch = 0 : i64, scratch_operands = 0 : i64, tpu.core_type = #tpu.core_type<tc>, window_params = [{transform_indices = @transform_0, window_bounds = array<i64: 8, 48>}, {pipeline_mode = #tpu.pipeline_mode<synchronous>, transform_indices = @transform_1, window_bounds = array<i64: 48, 512>}, {pipeline_mode = #tpu.pipeline_mode<synchronous>, transform_indices = @transform_2, window_bounds = array<i64: 1, 512>}, {pipeline_mode = #tpu.pipeline_mode<synchronous>, transform_indices = @transform_3, window_bounds = array<i64: 512, 512>}, {pipeline_mode = #tpu.pipeline_mode<synchronous>, transform_indices = @transform_4, window_bounds = array<i64: 1, 512>}, {pipeline_mode = #tpu.pipeline_mode<synchronous>, transform_indices = @transform_5, window_bounds = array<i64: 512, 128>}, {pipeline_mode = #tpu.pipeline_mode<synchronous>, transform_indices = @transform_6, window_bounds = array<i64: 1, 128>}, {transform_indices = @transform_7, window_bounds = array<i64: 8, 128>}]} {
    %c0 = arith.constant 0 : index
    %c0_0 = arith.constant 0 : index
    %0 = vector.load %arg1[%c0, %c0_0] : memref<8x48xf32, #tpu.memory_space<vmem>>, vector<8x48xf32>
    %1 = arith.truncf %0 : vector<8x48xf32> to vector<8x48xbf16>
    %c0_1 = arith.constant 0 : index
    %c0_2 = arith.constant 0 : index
    %2 = vector.load %arg2[%c0_1, %c0_2] : memref<48x512xbf16, #tpu.memory_space<vmem>>, vector<48x512xbf16>
    %cst = arith.constant dense<0.000000e+00> : vector<8x512xf32>
    %3 = tpu.matmul %1, %2, %cst {dimension_numbers = #tpu.dot_dimension_numbers<[1], [0], [0], [1], [0, 0, 1, 1], [], []>} : vector<8x48xbf16>, vector<48x512xbf16>, vector<8x512xf32> -> vector<8x512xf32>
    %c0_3 = arith.constant 0 : index
    %c0_4 = arith.constant 0 : index
    %4 = vector.load %arg3[%c0_3, %c0_4] : memref<1x512xf32, #tpu.memory_space<vmem>>, vector<1x512xf32>
    %5 = vector.broadcast %4 : vector<1x512xf32> to vector<8x512xf32>
    %6 = arith.addf %3, %5 : vector<8x512xf32>
    %cst_5 = arith.constant 0.000000e+00 : f32
    %7 = vector.broadcast %cst_5 : f32 to vector<8x512xf32>
    %8 = arith.maximumf %6, %7 : vector<8x512xf32>
    %9 = arith.truncf %8 : vector<8x512xf32> to vector<8x512xbf16>
    %c0_6 = arith.constant 0 : index
    %c0_7 = arith.constant 0 : index
    %10 = vector.load %arg4[%c0_6, %c0_7] : memref<512x512xbf16, #tpu.memory_space<vmem>>, vector<512x512xbf16>
    %cst_8 = arith.constant dense<0.000000e+00> : vector<8x512xf32>
    %11 = tpu.matmul %9, %10, %cst_8 {dimension_numbers = #tpu.dot_dimension_numbers<[1], [0], [0], [1], [0, 0, 1, 1], [], []>} : vector<8x512xbf16>, vector<512x512xbf16>, vector<8x512xf32> -> vector<8x512xf32>
    %c0_9 = arith.constant 0 : index
    %c0_10 = arith.constant 0 : index
    %12 = vector.load %arg5[%c0_9, %c0_10] : memref<1x512xf32, #tpu.memory_space<vmem>>, vector<1x512xf32>
    %13 = vector.broadcast %12 : vector<1x512xf32> to vector<8x512xf32>
    %14 = arith.addf %11, %13 : vector<8x512xf32>
    %cst_11 = arith.constant 0.000000e+00 : f32
    %15 = vector.broadcast %cst_11 : f32 to vector<8x512xf32>
    %16 = arith.maximumf %14, %15 : vector<8x512xf32>
    %17 = arith.truncf %16 : vector<8x512xf32> to vector<8x512xbf16>
    %c0_12 = arith.constant 0 : index
    %c0_13 = arith.constant 0 : index
    %18 = vector.load %arg6[%c0_12, %c0_13] : memref<512x128xbf16, #tpu.memory_space<vmem>>, vector<512x128xbf16>
    %cst_14 = arith.constant dense<0.000000e+00> : vector<8x128xf32>
    %19 = tpu.matmul %17, %18, %cst_14 {dimension_numbers = #tpu.dot_dimension_numbers<[1], [0], [0], [1], [0, 0, 1, 1], [], []>} : vector<8x512xbf16>, vector<512x128xbf16>, vector<8x128xf32> -> vector<8x128xf32>
    %c0_15 = arith.constant 0 : index
    %c0_16 = arith.constant 0 : index
    %20 = vector.load %arg7[%c0_15, %c0_16] : memref<1x128xf32, #tpu.memory_space<vmem>>, vector<1x128xf32>
    %21 = vector.broadcast %20 : vector<1x128xf32> to vector<8x128xf32>
    %22 = arith.addf %19, %21 : vector<8x128xf32>
    %23 = arith.truncf %22 : vector<8x128xf32> to vector<8x128xbf16>
    %c0_17 = arith.constant 0 : index
    %c0_18 = arith.constant 0 : index
    %24 = vector.load %arg8[%c0_17, %c0_18] : memref<8x128xbf16, #tpu.memory_space<vmem>>, vector<8x128xbf16>
    tpu.vector_store %arg8[%c0_17, %c0_18], %23 {strides = array<i32>} : memref<8x128xbf16, #tpu.memory_space<vmem>>, vector<8x128xbf16>,
    return
  }
  func.func @transform_0(%arg0: i32) -> (i32, i32) {
    %c0_i32 = arith.constant 0 : i32
    %c0_i32_0 = arith.constant 0 : i32
    return %arg0, %c0_i32 : i32, i32
  }
  func.func @transform_1(%arg0: i32) -> (i32, i32) {
    %c0_i32 = arith.constant 0 : i32
    %c0_i32_0 = arith.constant 0 : i32
    %c0_i32_1 = arith.constant 0 : i32
    return %c0_i32, %c0_i32_0 : i32, i32
  }
  func.func @transform_2(%arg0: i32) -> (i32, i32) {
    %c0_i32 = arith.constant 0 : i32
    %c0_i32_0 = arith.constant 0 : i32
    %c0_i32_1 = arith.constant 0 : i32
    return %c0_i32, %c0_i32_0 : i32, i32
  }
  func.func @transform_3(%arg0: i32) -> (i32, i32) {
    %c0_i32 = arith.constant 0 : i32
    %c0_i32_0 = arith.constant 0 : i32
    %c0_i32_1 = arith.constant 0 : i32
    return %c0_i32, %c0_i32_0 : i32, i32
  }
  func.func @transform_4(%arg0: i32) -> (i32, i32) {
    %c0_i32 = arith.constant 0 : i32
    %c0_i32_0 = arith.constant 0 : i32
    %c0_i32_1 = arith.constant 0 : i32
    return %c0_i32, %c0_i32_0 : i32, i32
  }
  func.func @transform_5(%arg0: i32) -> (i32, i32) {
    %c0_i32 = arith.constant 0 : i32
    %c0_i32_0 = arith.constant 0 : i32
    %c0_i32_1 = arith.constant 0 : i32
    return %c0_i32, %c0_i32_0 : i32, i32
  }
  func.func @transform_6(%arg0: i32) -> (i32, i32) {
    %c0_i32 = arith.constant 0 : i32
    %c0_i32_0 = arith.constant 0 : i32
    %c0_i32_1 = arith.constant 0 : i32
    return %c0_i32, %c0_i32_0 : i32, i32
  }
  func.func @transform_7(%arg0: i32) -> (i32, i32) {
    %c0_i32 = arith.constant 0 : i32
    %c0_i32_0 = arith.constant 0 : i32
    return %arg0, %c0_i32 : i32, i32
  }
}

module attributes {stable_mosaic.version = 11 : i64} {
  func.func @_qnet_kernel(%arg0: i32, %arg1: memref<8x48xf32, #tpu.memory_space<vmem>>, %arg2: memref<48x512xbf16, #tpu.memory_space<vmem>>, %arg3: memref<1x512xf32, #tpu.memory_space<vmem>>, %arg4: memref<512x512xbf16, #tpu.memory_space<vmem>>, %arg5: memref<1x512xf32, #tpu.memory_space<vmem>>, %arg6: memref<512x128xbf16, #tpu.memory_space<vmem>>, %arg7: memref<1x128xf32, #tpu.memory_space<vmem>>, %arg8: memref<8x128xbf16, #tpu.memory_space<vmem>>) attributes {dimension_semantics = [#tpu.dimension_semantics<parallel>], iteration_bounds = array<i64: 1>, scalar_prefetch = 0 : i64, scratch_operands = 0 : i64, tpu.core_type = #tpu.core_type<tc>, window_params = [{transform_indices = @transform_0, window_bounds = array<i64: 8, 48>}, {pipeline_mode = #tpu.pipeline_mode<synchronous>, transform_indices = @transform_1, window_bounds = array<i64: 48, 512>}, {pipeline_mode = #tpu.pipeline_mode<synchronous>, transform_indices = @transform_2, window_bounds = array<i64: 1, 512>}, {pipeline_mode = #tpu.pipeline_mode<synchronous>, transform_indices = @transform_3, window_bounds = array<i64: 512, 512>}, {pipeline_mode = #tpu.pipeline_mode<synchronous>, transform_indices = @transform_4, window_bounds = array<i64: 1, 512>}, {pipeline_mode = #tpu.pipeline_mode<synchronous>, transform_indices = @transform_5, window_bounds = array<i64: 512, 128>}, {pipeline_mode = #tpu.pipeline_mode<synchronous>, transform_indices = @transform_6, window_bounds = array<i64: 1, 128>}, {transform_indices = @transform_7, window_bounds = array<i64: 8, 128>}]} {
    %c0 = arith.constant 0 : index
    %c0_0 = arith.constant 0 : index
    %0 = vector.load %arg1[%c0, %c0_0] : memref<8x48xf32, #tpu.memory_space<vmem>>, vector<8x48xf32>
    %1 = arith.truncf %0 : vector<8x48xf32> to vector<8x48xbf16>
    %c0_1 = arith.constant 0 : index
    %c0_2 = arith.constant 0 : index
    %2 = vector.load %arg2[%c0_1, %c0_2] : memref<48x512xbf16, #tpu.memory_space<vmem>>, vector<48x512xbf16>
    %cst = arith.constant dense<0.000000e+00> : vector<8x512xf32>
    %3 = tpu.matmul %1, %2, %cst {dimension_numbers = #tpu.dot_dimension_numbers<[1], [0], [0], [1], [0, 0, 1, 1], [], []>} : vector<8x48xbf16>, vector<48x512xbf16>, vector<8x512xf32> -> vector<8x512xf32>
    %c0_3 = arith.constant 0 : index
    %c0_4 = arith.constant 0 : index
    %4 = vector.load %arg3[%c0_3, %c0_4] : memref<1x512xf32, #tpu.memory_space<vmem>>, vector<1x512xf32>
    %5 = vector.broadcast %4 : vector<1x512xf32> to vector<8x512xf32>
    %6 = arith.addf %3, %5 : vector<8x512xf32>
    %cst_5 = arith.constant 0.000000e+00 : f32
    %7 = vector.broadcast %cst_5 : f32 to vector<8x512xf32>
    %8 = arith.maximumf %6, %7 : vector<8x512xf32>
    %9 = arith.truncf %8 : vector<8x512xf32> to vector<8x512xbf16>
    %c0_6 = arith.constant 0 : index
    %c0_7 = arith.constant 0 : index
    %10 = vector.load %arg4[%c0_6, %c0_7] : memref<512x512xbf16, #tpu.memory_space<vmem>>, vector<512x512xbf16>
    %cst_8 = arith.constant dense<0.000000e+00> : vector<8x512xf32>
    %11 = tpu.matmul %9, %10, %cst_8 {dimension_numbers = #tpu.dot_dimension_numbers<[1], [0], [0], [1], [0, 0, 1, 1], [], []>} : vector<8x512xbf16>, vector<512x512xbf16>, vector<8x512xf32> -> vector<8x512xf32>
    %c0_9 = arith.constant 0 : index
    %c0_10 = arith.constant 0 : index
    %12 = vector.load %arg5[%c0_9, %c0_10] : memref<1x512xf32, #tpu.memory_space<vmem>>, vector<1x512xf32>
    %13 = vector.broadcast %12 : vector<1x512xf32> to vector<8x512xf32>
    %14 = arith.addf %11, %13 : vector<8x512xf32>
    %cst_11 = arith.constant 0.000000e+00 : f32
    %15 = vector.broadcast %cst_11 : f32 to vector<8x512xf32>
    %16 = arith.maximumf %14, %15 : vector<8x512xf32>
    %17 = arith.truncf %16 : vector<8x512xf32> to vector<8x512xbf16>
    %c0_12 = arith.constant 0 : index
    %c0_13 = arith.constant 0 : index
    %18 = vector.load %arg6[%c0_12, %c0_13] : memref<512x128xbf16, #tpu.memory_space<vmem>>, vector<512x128xbf16>
    %cst_14 = arith.constant dense<0.000000e+00> : vector<8x128xf32>
    %19 = tpu.matmul %17, %18, %cst_14 {dimension_numbers = #tpu.dot_dimension_numbers<[1], [0], [0], [1], [0, 0, 1, 1], [], []>} : vector<8x512xbf16>, vector<512x128xbf16>, vector<8x128xf32> -> vector<8x128xf32>
    %c0_15 = arith.constant 0 : index
    %c0_16 = arith.constant 0 : index
    %20 = vector.load %arg7[%c0_15, %c0_16] : memref<1x128xf32, #tpu.memory_space<vmem>>, vector<1x128xf32>
    %21 = vector.broadcast %20 : vector<1x128xf32> to vector<8x128xf32>
    %22 = arith.addf %19, %21 : vector<8x128xf32>
    %23 = arith.truncf %22 : vector<8x128xf32> to vector<8x128xbf16>
    %c0_17 = arith.constant 0 : index
    %c0_18 = arith.constant 0 : index
    %24 = vector.load %arg8[%c0_17, %c0_18] : memref<8x128xbf16, #tpu.memory_space<vmem>>, vector<8x128xbf16>
    tpu.vector_store %arg8[%c0_17, %c0_18], %23 {strides = array<i32>} : memref<8x128xbf16, #tpu.memory_space<vmem>>, vector<8x128xbf16>,
    return
  }
  func.func @transform_0(%arg0: i32) -> (i32, i32) {
    %c0_i32 = arith.constant 0 : i32
    %c0_i32_0 = arith.constant 0 : i32
    return %arg0, %c0_i32 : i32, i32
  }
  func.func @transform_1(%arg0: i32) -> (i32, i32) {
    %c0_i32 = arith.constant 0 : i32
    %c0_i32_0 = arith.constant 0 : i32
    %c0_i32_1 = arith.constant 0 : i32
    return %c0_i32, %c0_i32_0 : i32, i32
  }
  func.func @transform_2(%arg0: i32) -> (i32, i32) {
    %c0_i32 = arith.constant 0 : i32
    %c0_i32_0 = arith.constant 0 : i32
    %c0_i32_1 = arith.constant 0 : i32
    return %c0_i32, %c0_i32_0 : i32, i32
  }
  func.func @transform_3(%arg0: i32) -> (i32, i32) {
    %c0_i32 = arith.constant 0 : i32
    %c0_i32_0 = arith.constant 0 : i32
    %c0_i32_1 = arith.constant 0 : i32
    return %c0_i32, %c0_i32_0 : i32, i32
  }
  func.func @transform_4(%arg0: i32) -> (i32, i32) {
    %c0_i32 = arith.constant 0 : i32
    %c0_i32_0 = arith.constant 0 : i32
    %c0_i32_1 = arith.constant 0 : i32
    return %c0_i32, %c0_i32_0 : i32, i32
  }
  func.func @transform_5(%arg0: i32) -> (i32, i32) {
    %c0_i32 = arith.constant 0 : i32
    %c0_i32_0 = arith.constant 0 : i32
    %c0_i32_1 = arith.constant 0 : i32
    return %c0_i32, %c0_i32_0 : i32, i32
  }
  func.func @transform_6(%arg0: i32) -> (i32, i32) {
    %c0_i32 = arith.constant 0 : i32
    %c0_i32_0 = arith.constant 0 : i32
    %c0_i32_1 = arith.constant 0 : i32
    return %c0_i32, %c0_i32_0 : i32, i32
  }
  func.func @transform_7(%arg0: i32) -> (i32, i32) {
    %c0_i32 = arith.constant 0 : i32
    %c0_i32_0 = arith.constant 0 : i32
    return %arg0, %c0_i32 : i32, i32
  }
}

</mosaic_0001>

<llo_original>
// kernel: qnetwork_forward.1
$region0: #{qnetwork_forward.1}
  #allocation0 [shape = 'u32[]', space=smem, size = 0x4, offset = 0x4, fixed_abs, tag = 'smem constant byte address 0x4 - core index']
  #allocation1 [shape = 'u32[144,128]{1,0:T(1,128)}', space=vmem, size = 0x12000, scoped, tag = 'internal scratch']
  %s0 = inlined_call_operand.hbm [shape: f32[8,48], index: 0, kind: input, shape index: {}]
  %s1 = inlined_call_operand.hbm [shape: bf16[48,512], index: 1, kind: input, shape index: {}]
  %s2 = inlined_call_operand.vmem [shape: f32[1,512], index: 2, kind: input, shape index: {}]
  %s3 = inlined_call_operand.hbm [shape: bf16[512,512], index: 3, kind: input, shape index: {}]
  %s4 = inlined_call_operand.vmem [shape: f32[1,512], index: 4, kind: input, shape index: {}]
  %s5 = inlined_call_operand.hbm [shape: bf16[512,128], index: 5, kind: input, shape index: {}]
  %s6 = inlined_call_operand.vmem [shape: f32[1,128], index: 6, kind: input, shape index: {}]
  %s7 = inlined_call_operand.hbm [shape: bf16[8,128], index: 7, kind: output, shape index: {}]
  %s8 = sld [smem:[#allocation0]]
  $region54: #{qnetwork_forward.1} parent=0
    _
  %s10 = ssub.s32 1, %s8
  %s11 = scalar_select 0, %s10, %s8
  $region1: #{qnetwork_forward.1} parent=0
    #allocation2 [shape = 'u8[4096]{0}', space=vmem, size = 0x1000, scoped, tag = 'input window, operand 0, single buffered']
    #allocation3 [shape = 's32[1]{0}', space=sflag, size = 0x4, scoped, tag = 'scoped memory for qnetwork_forward.1']
    #allocation4 [shape = 's32[1]{0}', space=sflag, size = 0x4, scoped, tag = 'scoped memory for qnetwork_forward.1']
    #allocation5 [shape = 'u8[49152]{0}', space=vmem, size = 0xc000, scoped, tag = 'input window, operand 1, single buffered']
    #allocation6 [shape = 's32[1]{0}', space=sflag, size = 0x4, scoped, tag = 'scoped memory for qnetwork_forward.1']
    #allocation7 [shape = 'u8[524288]{0}', space=vmem, size = 0x80000, scoped, tag = 'input window, operand 3, single buffered']
    #allocation8 [shape = 'u8[131072]{0}', space=vmem, size = 0x20000, scoped, tag = 'input window, operand 5, single buffered']
    #allocation9 [shape = 's32[1]{0}', space=sflag, size = 0x4, scoped, tag = 'scoped memory for qnetwork_forward.1']
    #allocation10 [shape = 'u8[2048]{0}', space=vmem, size = 0x800, scoped, tag = 'output window, operand 0, single buffered']
    %12 = vsyncpa [#allocation3], 0
    %13 = vsyncpa [#allocation6], 0
    %14 = vsyncpa [#allocation9], 0
    %15 = vsyncpa [#allocation4], 0
    // Predicated region
    $region2: #{qnetwork_forward.1} parent=1 // pred_check
      _
    $region3: #{qnetwork_forward.1} parent=1 // pred_check_branch
      %17 = sbr.rel (0) target = $region5
    $region4: #{qnetwork_forward.1} parent=1 // pred_region
      %s19 = ssub.s32 128, 128
      %20 = vsyncadd [#allocation3], %s19
      %s22 = sshll.u32 [#allocation2], 4
      %s23 = int_to_ptr.vmem [resolvable:$true] %s22
      %25 = dma.hbm_to_vmem [thread:$0]  %s0, 128, %s23, [#allocation3]
    $region5: #{qnetwork_forward.1} parent=1 // pred_fallthru
      _
    // Predicated region
    $region6: #{qnetwork_forward.1} parent=1 // pred_check
      _
    $region7: #{qnetwork_forward.1} parent=1 // pred_check_branch
      %27 = sbr.rel (0) target = $region9
    $region8: #{qnetwork_forward.1} parent=1 // pred_region
      %s29 = ssub.s32 1536, 1536
      %30 = vsyncadd [#allocation6], %s29
      %s31 = sshll.u32 [#allocation5], 4
      %s32 = int_to_ptr.vmem [resolvable:$true] %s31
      %37 = dma.hbm_to_vmem [thread:$0]  %s1, 1536, %s32, [#allocation6], 256, 256, 16
    $region9: #{qnetwork_forward.1} parent=1 // pred_fallthru
      _
    // Predicated region
    $region10: #{qnetwork_forward.1} parent=1 // pred_check
      _
    $region11: #{qnetwork_forward.1} parent=1 // pred_check_branch
      %39 = sbr.rel (0) target = $region13
    $region12: #{qnetwork_forward.1} parent=1 // pred_region
      _
    $region13: #{qnetwork_forward.1} parent=1 // pred_fallthru
      _
    // Predicated region
    $region14: #{qnetwork_forward.1} parent=1 // pred_check
      _
    $region15: #{qnetwork_forward.1} parent=1 // pred_check_branch
      %41 = sbr.rel (0) target = $region17
    $region16: #{qnetwork_forward.1} parent=1 // pred_region
      %s43 = ssub.s32 16384, 16384
      %44 = vsyncadd [#allocation6], %s43
      %s45 = sshll.u32 [#allocation7], 4
      %s46 = int_to_ptr.vmem [resolvable:$true] %s45
      %51 = dma.hbm_to_vmem [thread:$0]  %s3, 16384, %s46, [#allocation6], 256, 256, 16
    $region17: #{qnetwork_forward.1} parent=1 // pred_fallthru
      _
    // Predicated region
    $region18: #{qnetwork_forward.1} parent=1 // pred_check
      _
    $region19: #{qnetwork_forward.1} parent=1 // pred_check_branch
      %53 = sbr.rel (0) target = $region21
    $region20: #{qnetwork_forward.1} parent=1 // pred_region
      _
    $region21: #{qnetwork_forward.1} parent=1 // pred_fallthru
      _
    // Predicated region
    $region22: #{qnetwork_forward.1} parent=1 // pred_check
      _
    $region23: #{qnetwork_forward.1} parent=1 // pred_check_branch
      %55 = sbr.rel (0) target = $region25
    $region24: #{qnetwork_forward.1} parent=1 // pred_region
      %s57 = ssub.s32 4096, 4096
      %58 = vsyncadd [#allocation9], %s57
      %s59 = sshll.u32 [#allocation8], 4
      %s60 = int_to_ptr.vmem [resolvable:$true] %s59
      %65 = dma.hbm_to_vmem [thread:$0]  %s5, 4096, %s60, [#allocation9], 64, 64, 4
    $region25: #{qnetwork_forward.1} parent=1 // pred_fallthru
      _
    // Predicated region
    $region26: #{qnetwork_forward.1} parent=1 // pred_check
      _
    $region27: #{qnetwork_forward.1} parent=1 // pred_check_branch
      %67 = sbr.rel (0) target = $region29
    $region28: #{qnetwork_forward.1} parent=1 // pred_region
      _
    $region29: #{qnetwork_forward.1} parent=1 // pred_fallthru
      _
    // Predicated region
    $region30: #{qnetwork_forward.1} parent=1 // pred_check
      _
    $region31: #{qnetwork_forward.1} parent=1 // pred_check_branch
      %69 = sbr.rel (0) target = $region33
    $region32: #{qnetwork_forward.1} parent=1 // pred_region
      %70 = dma.done [#allocation3], 128
    $region33: #{qnetwork_forward.1} parent=1 // pred_fallthru
      _
    // Predicated region
    $region34: #{qnetwork_forward.1} parent=1 // pred_check
      _
    $region35: #{qnetwork_forward.1} parent=1 // pred_check_branch
      %72 = sbr.rel (0) target = $region37
    $region36: #{qnetwork_forward.1} parent=1 // pred_region
      %73 = dma.done [#allocation6], 1536
    $region37: #{qnetwork_forward.1} parent=1 // pred_fallthru
      _
    // Predicated region
    $region38: #{qnetwork_forward.1} parent=1 // pred_check
      _
    $region39: #{qnetwork_forward.1} parent=1 // pred_check_branch
      %75 = sbr.rel (0) target = $region41
    $region40: #{qnetwork_forward.1} parent=1 // pred_region
      %76 = dma.done [#allocation6], 16384
    $region41: #{qnetwork_forward.1} parent=1 // pred_fallthru
      _
    // Predicated region
    $region42: #{qnetwork_forward.1} parent=1 // pred_check
      _
    $region43: #{qnetwork_forward.1} parent=1 // pred_check_branch
      %78 = sbr.rel (0) target = $region45
    $region44: #{qnetwork_forward.1} parent=1 // pred_region
      %79 = dma.done [#allocation9], 4096
    $region45: #{qnetwork_forward.1} parent=1 // pred_fallthru
      _
    %v81 = vld [vmem:[#allocation2] sm:$0xff]
    %v82 = vpack.c.bf16 %v81, %v81
    %v83 = vld [vmem:[#allocation5] sm:$0xff]
    %v84 = vld [vmem:[#allocation5 + $0x8] sm:$0xff]
    %v85 = vld [vmem:[#allocation5 + $0x10] sm:$0xff]
    %v86 = vld [vmem:[#allocation5 + $0x18] sm:$0xff]
    %v87 = vld [vmem:[#allocation5 + $0x20] sm:$0xff]
    %v88 = vld [vmem:[#allocation5 + $0x28] sm:$0xff]
    %v89 = vld [vmem:[#allocation5 + $0x30] sm:$0xff]
    %v90 = vld [vmem:[#allocation5 + $0x38] sm:$0xff]
    %v91 = vld [vmem:[#allocation5 + $0x40] sm:$0xff]
    %v92 = vld [vmem:[#allocation5 + $0x48] sm:$0xff]
    %v93 = vld [vmem:[#allocation5 + $0x50] sm:$0xff]
    %v94 = vld [vmem:[#allocation5 + $0x58] sm:$0xff]
    %v95 = vld [vmem:[%s2] sm:$0xf]
    %v97 = vlaneseq
    %v98 = vshrl.u32 %v97, 7
    %v99 = vsub.s32 0, %v98
    %v100 = vrot.slane %v95, %v99
    %v101 = vlaneseq
    %v102 = vshrl.u32 %v101, 7
    %v103 = vsub.s32 1, %v102
    %v104 = vrot.slane %v95, %v103
    %v105 = vlaneseq
    %v106 = vshrl.u32 %v105, 7
    %v107 = vsub.s32 2, %v106
    %v108 = vrot.slane %v95, %v107
    %v109 = vlaneseq
    %v110 = vshrl.u32 %v109, 7
    %v111 = vsub.s32 3, %v110
    %v112 = vrot.slane %v95, %v111
    %v129 = vunpack.c.l.b16 %v83
    %v130 = vunpack.c.h.b16 %v83
    %v131 = vunpack.c.l.b16 %v84
    %v132 = vunpack.c.h.b16 %v84
    %v133 = vunpack.c.l.b16 %v85
    %v134 = vunpack.c.h.b16 %v85
    %v135 = vunpack.c.l.b16 %v86
    %v136 = vunpack.c.h.b16 %v86
    %v137 = vunpack.c.l.b16 %v87
    %v138 = vunpack.c.h.b16 %v87
    %v139 = vunpack.c.l.b16 %v88
    %v140 = vunpack.c.h.b16 %v88
    %v141 = vunpack.c.l.b16 %v89
    %v142 = vunpack.c.h.b16 %v89
    %v143 = vunpack.c.l.b16 %v90
    %v144 = vunpack.c.h.b16 %v90
    %v145 = vunpack.c.l.b16 %v91
    %v146 = vunpack.c.h.b16 %v91
    %v147 = vunpack.c.l.b16 %v92
    %v148 = vunpack.c.h.b16 %v92
    %v149 = vunpack.c.l.b16 %v93
    %v150 = vunpack.c.h.b16 %v93
    %v151 = vunpack.c.l.b16 %v94
    %v152 = vunpack.c.h.b16 %v94
    %v153 = vpack.c.b16 %v133, %v129
    %v154 = vpack.c.b16 %v134, %v130
    %v155 = vpack.c.b16 %v135, %v131
    %v156 = vpack.c.b16 %v136, %v132
    %v157 = vpack.c.b16 %v141, %v137
    %v158 = vpack.c.b16 %v142, %v138
    %v159 = vpack.c.b16 %v143, %v139
    %v160 = vpack.c.b16 %v144, %v140
    %v161 = vpack.c.b16 %v149, %v145
    %v162 = vpack.c.b16 %v150, %v146
    %v163 = vpack.c.b16 %v151, %v147
    %v164 = vpack.c.b16 %v152, %v148
    %vm177 = vcmask 392192
    %v179 = vsel %vm177, %v82, 0
    %181 = vmatprep.subr.bf16.mxu0 %v154
    %182 = vmatpush1.bf16.msra.mxu0 %v153
    %183 = vmatprep.subr.bf16.mxu0 %v158
    %184 = vmatpush1.bf16.msra.mxu0 %v157
    %185 = vmatprep.subr.bf16.mxu0 %v162
    %186 = vmatpush1.bf16.msra.mxu0 %v161
    %187 = vmatprep.subr.bf16.mxu0 0
    %188 = vmatpush1.bf16.msra.mxu0 0
    %189 = vmatprep.subr.bf16.mxu0 0
    %190 = vmatpush1.bf16.msra.mxu0 0
    %191 = vmatprep.subr.bf16.mxu0 0
    %192 = vmatpush1.bf16.msra.mxu0 0
    %193 = vmatprep.subr.bf16.mxu0 0
    %194 = vmatpush1.bf16.msra.mxu0 0
    %195 = vmatprep.subr.bf16.mxu0 0
    %196 = vmatpush1.bf16.msra.mxu0 0
    %197 = vmatprep.subr.bf16.mxu0 0
    %198 = vmatpush1.bf16.msra.mxu0 0
    %199 = vmatprep.subr.bf16.mxu0 0
    %200 = vmatpush1.bf16.msra.mxu0 0
    %201 = vmatprep.subr.bf16.mxu0 0
    %202 = vmatpush1.bf16.msra.mxu0 0
    %203 = vmatprep.subr.bf16.mxu0 0
    %204 = vmatpush1.bf16.msra.mxu0 0
    %205 = vmatprep.subr.bf16.mxu0 0
    %206 = vmatpush1.bf16.msra.mxu0 0
    %207 = vmatprep.subr.bf16.mxu0 0
    %208 = vmatpush1.bf16.msra.mxu0 0
    %209 = vmatprep.subr.bf16.mxu0 0
    %210 = vmatpush1.bf16.msra.mxu0 0
    %211 = vmatprep.subr.bf16.mxu0 0
    %212 = vmatpush1.bf16.msra.mxu0 0
    %213 = vmatprep.mubr.bf16.mxu0 0
    %214 = vmatmul.mubr.bf16.gmra.mrb[0].mxu0 %v179
    %v215 = vpop.f32.mrb[0].mxu0
    %v216 = vadd.f32 %v100, %v215
    %v217 = vpop.f32.mrb[0].mxu0
    %v218 = vadd.f32 %v104, %v217
    %v219 = vpop.f32.mrb[0].mxu0
    %v220 = vpop.f32.mrb[0].mxu0
    %221 = vdwg.mxu0
    %222 = vmatprep.subr.bf16.mxu0 %v156
    %223 = vmatpush1.bf16.msra.mxu0 %v155
    %224 = vmatprep.subr.bf16.mxu0 %v160
    %225 = vmatpush1.bf16.msra.mxu0 %v159
    %226 = vmatprep.subr.bf16.mxu0 %v164
    %227 = vmatpush1.bf16.msra.mxu0 %v163
    %228 = vmatprep.subr.bf16.mxu0 0
    %229 = vmatpush1.bf16.msra.mxu0 0
    %230 = vmatprep.subr.bf16.mxu0 0
    %231 = vmatpush1.bf16.msra.mxu0 0
    %232 = vmatprep.subr.bf16.mxu0 0
    %233 = vmatpush1.bf16.msra.mxu0 0
    %234 = vmatprep.subr.bf16.mxu0 0
    %235 = vmatpush1.bf16.msra.mxu0 0
    %236 = vmatprep.subr.bf16.mxu0 0
    %237 = vmatpush1.bf16.msra.mxu0 0
    %238 = vmatprep.subr.bf16.mxu0 0
    %239 = vmatpush1.bf16.msra.mxu0 0
    %240 = vmatprep.subr.bf16.mxu0 0
    %241 = vmatpush1.bf16.msra.mxu0 0
    %242 = vmatprep.subr.bf16.mxu0 0
    %243 = vmatpush1.bf16.msra.mxu0 0
    %244 = vmatprep.subr.bf16.mxu0 0
    %245 = vmatpush1.bf16.msra.mxu0 0
    %246 = vmatprep.subr.bf16.mxu0 0
    %247 = vmatpush1.bf16.msra.mxu0 0
    %248 = vmatprep.subr.bf16.mxu0 0
    %249 = vmatpush1.bf16.msra.mxu0 0
    %250 = vmatprep.subr.bf16.mxu0 0
    %251 = vmatpush1.bf16.msra.mxu0 0
    %252 = vmatprep.subr.bf16.mxu0 0
    %253 = vmatpush1.bf16.msra.mxu0 0
    %254 = vmatprep.mubr.bf16.mxu0 0
    %255 = vmatmul.mubr.bf16.gmra.mrb[0].mxu0 %v179
    %v256 = vpop.f32.mrb[0].mxu0
    %v257 = vadd.f32 %v108, %v256
    %v258 = vpop.f32.mrb[0].mxu0
    %v259 = vadd.f32 %v112, %v258
    %v260 = vpop.f32.mrb[0].mxu0
    %v261 = vpop.f32.mrb[0].mxu0
    %262 = vdwg.mxu0
    %v263 = vmax.f32 %v216, 0.0
    %v264 = vmax.f32 %v218, 0.0
    %v265 = vmax.f32 %v257, 0.0
    %v266 = vmax.f32 %v259, 0.0
    %v267 = vpack.c.bf16 %v263, %v263
    %v268 = vpack.c.bf16 %v264, %v264
    %v269 = vpack.c.bf16 %v265, %v265
    %v270 = vpack.c.bf16 %v266, %v266
    %v271 = vld [vmem:[#allocation7] sm:$0xff]
    %v272 = vld [vmem:[#allocation7 + $0x8] sm:$0xff]
    %v273 = vld [vmem:[#allocation7 + $0x10] sm:$0xff]
    %v274 = vld [vmem:[#allocation7 + $0x18] sm:$0xff]
    %v275 = vld [vmem:[#allocation7 + $0x20] sm:$0xff]
    %v276 = vld [vmem:[#allocation7 + $0x28] sm:$0xff]
    %v277 = vld [vmem:[#allocation7 + $0x30] sm:$0xff]
    %v278 = vld [vmem:[#allocation7 + $0x38] sm:$0xff]
    %v279 = vld [vmem:[#allocation7 + $0x40] sm:$0xff]
    %v280 = vld [vmem:[#allocation7 + $0x48] sm:$0xff]
    %v281 = vld [vmem:[#allocation7 + $0x50] sm:$0xff]
    %v282 = vld [vmem:[#allocation7 + $0x58] sm:$0xff]
    %v283 = vld [vmem:[#allocation7 + $0x60] sm:$0xff]
    %v284 = vld [vmem:[#allocation7 + $0x68] sm:$0xff]
    %v285 = vld [vmem:[#allocation7 + $0x70] sm:$0xff]
    %v286 = vld [vmem:[#allocation7 + $0x78] sm:$0xff]
    %v287 = vld [vmem:[#allocation7 + $0x80] sm:$0xff]
    %v288 = vld [vmem:[#allocation7 + $0x88] sm:$0xff]
    %v289 = vld [vmem:[#allocation7 + $0x90] sm:$0xff]
    %v290 = vld [vmem:[#allocation7 + $0x98] sm:$0xff]
    %v291 = vld [vmem:[#allocation7 + $0xa0] sm:$0xff]
    %v292 = vld [vmem:[#allocation7 + $0xa8] sm:$0xff]
    %v293 = vld [vmem:[#allocation7 + $0xb0] sm:$0xff]
    %v294 = vld [vmem:[#allocation7 + $0xb8] sm:$0xff]
    %v295 = vld [vmem:[#allocation7 + $0xc0] sm:$0xff]
    %v296 = vld [vmem:[#allocation7 + $0xc8] sm:$0xff]
    %v297 = vld [vmem:[#allocation7 + $0xd0] sm:$0xff]
    %v298 = vld [vmem:[#allocation7 + $0xd8] sm:$0xff]
    %v299 = vld [vmem:[#allocation7 + $0xe0] sm:$0xff]
    %v300 = vld [vmem:[#allocation7 + $0xe8] sm:$0xff]
    %v301 = vld [vmem:[#allocation7 + $0xf0] sm:$0xff]
    %v302 = vld [vmem:[#allocation7 + $0xf8] sm:$0xff]
    %v303 = vld [vmem:[#allocation7 + $0x100] sm:$0xff]
    %v304 = vld [vmem:[#allocation7 + $0x108] sm:$0xff]
    %v305 = vld [vmem:[#allocation7 + $0x110] sm:$0xff]
    %v306 = vld [vmem:[#allocation7 + $0x118] sm:$0xff]
    %v307 = vld [vmem:[#allocation7 + $0x120] sm:$0xff]
    %v308 = vld [vmem:[#allocation7 + $0x128] sm:$0xff]
    %v309 = vld [vmem:[#allocation7 + $0x130] sm:$0xff]
    %v310 = vld [vmem:[#allocation7 + $0x138] sm:$0xff]
    %v311 = vld [vmem:[#allocation7 + $0x140] sm:$0xff]
    %v312 = vld [vmem:[#allocation7 + $0x148] sm:$0xff]
    %v313 = vld [vmem:[#allocation7 + $0x150] sm:$0xff]
    %v314 = vld [vmem:[#allocation7 + $0x158] sm:$0xff]
    %v315 = vld [vmem:[#allocation7 + $0x160] sm:$0xff]
    %v316 = vld [vmem:[#allocation7 + $0x168] sm:$0xff]
    %v317 = vld [vmem:[#allocation7 + $0x170] sm:$0xff]
    %v318 = vld [vmem:[#allocation7 + $0x178] sm:$0xff]
    %v319 = vld [vmem:[#allocation7 + $0x180] sm:$0xff]
    %v320 = vld [vmem:[#allocation7 + $0x188] sm:$0xff]
    %v321 = vld [vmem:[#allocation7 + $0x190] sm:$0xff]
    %v322 = vld [vmem:[#allocation7 + $0x198] sm:$0xff]
    %v323 = vld [vmem:[#allocation7 + $0x1a0] sm:$0xff]
    %v324 = vld [vmem:[#allocation7 + $0x1a8] sm:$0xff]
    %v325 = vld [vmem:[#allocation7 + $0x1b0] sm:$0xff]
    %v326 = vld [vmem:[#allocation7 + $0x1b8] sm:$0xff]
    %v327 = vld [vmem:[#allocation7 + $0x1c0] sm:$0xff]
    %v328 = vld [vmem:[#allocation7 + $0x1c8] sm:$0xff]
    %v329 = vld [vmem:[#allocation7 + $0x1d0] sm:$0xff]
    %v330 = vld [vmem:[#allocation7 + $0x1d8] sm:$0xff]
    %v331 = vld [vmem:[#allocation7 + $0x1e0] sm:$0xff]
    %v332 = vld [vmem:[#allocation7 + $0x1e8] sm:$0xff]
    %v333 = vld [vmem:[#allocation7 + $0x1f0] sm:$0xff]
    %v334 = vld [vmem:[#allocation7 + $0x1f8] sm:$0xff]
    %v335 = vld [vmem:[#allocation7 + $0x200] sm:$0xff]
    %v336 = vld [vmem:[#allocation7 + $0x208] sm:$0xff]
    %v337 = vld [vmem:[#allocation7 + $0x210] sm:$0xff]
    %v338 = vld [vmem:[#allocation7 + $0x218] sm:$0xff]
    %v339 = vld [vmem:[#allocation7 + $0x220] sm:$0xff]
    %v340 = vld [vmem:[#allocation7 + $0x228] sm:$0xff]
    %v341 = vld [vmem:[#allocation7 + $0x230] sm:$0xff]
    %v342 = vld [vmem:[#allocation7 + $0x238] sm:$0xff]
    %v343 = vld [vmem:[#allocation7 + $0x240] sm:$0xff]
    %v344 = vld [vmem:[#allocation7 + $0x248] sm:$0xff]
    %v345 = vld [vmem:[#allocation7 + $0x250] sm:$0xff]
    %v346 = vld [vmem:[#allocation7 + $0x258] sm:$0xff]
    %v347 = vld [vmem:[#allocation7 + $0x260] sm:$0xff]
    %v348 = vld [vmem:[#allocation7 + $0x268] sm:$0xff]
    %v349 = vld [vmem:[#allocation7 + $0x270] sm:$0xff]
    %v350 = vld [vmem:[#allocation7 + $0x278] sm:$0xff]
    %v351 = vld [vmem:[#allocation7 + $0x280] sm:$0xff]
    %v352 = vld [vmem:[#allocation7 + $0x288] sm:$0xff]
    %v353 = vld [vmem:[#allocation7 + $0x290] sm:$0xff]
    %v354 = vld [vmem:[#allocation7 + $0x298] sm:$0xff]
    %v355 = vld [vmem:[#allocation7 + $0x2a0] sm:$0xff]
    %v356 = vld [vmem:[#allocation7 + $0x2a8] sm:$0xff]
    %v357 = vld [vmem:[#allocation7 + $0x2b0] sm:$0xff]
    %v358 = vld [vmem:[#allocation7 + $0x2b8] sm:$0xff]
    %v359 = vld [vmem:[#allocation7 + $0x2c0] sm:$0xff]
    %v360 = vld [vmem:[#allocation7 + $0x2c8] sm:$0xff]
    %v361 = vld [vmem:[#allocation7 + $0x2d0] sm:$0xff]
    %v362 = vld [vmem:[#allocation7 + $0x2d8] sm:$0xff]
    %v363 = vld [vmem:[#allocation7 + $0x2e0] sm:$0xff]
    %v364 = vld [vmem:[#allocation7 + $0x2e8] sm:$0xff]
    %v365 = vld [vmem:[#allocation7 + $0x2f0] sm:$0xff]
    %v366 = vld [vmem:[#allocation7 + $0x2f8] sm:$0xff]
    %v367 = vld [vmem:[#allocation7 + $0x300] sm:$0xff]
    %v368 = vld [vmem:[#allocation7 + $0x308] sm:$0xff]
    %v369 = vld [vmem:[#allocation7 + $0x310] sm:$0xff]
    %v370 = vld [vmem:[#allocation7 + $0x318] sm:$0xff]
    %v371 = vld [vmem:[#allocation7 + $0x320] sm:$0xff]
    %v372 = vld [vmem:[#allocation7 + $0x328] sm:$0xff]
    %v373 = vld [vmem:[#allocation7 + $0x330] sm:$0xff]
    %v374 = vld [vmem:[#allocation7 + $0x338] sm:$0xff]
    %v375 = vld [vmem:[#allocation7 + $0x340] sm:$0xff]
    %v376 = vld [vmem:[#allocation7 + $0x348] sm:$0xff]
    %v377 = vld [vmem:[#allocation7 + $0x350] sm:$0xff]
    %v378 = vld [vmem:[#allocation7 + $0x358] sm:$0xff]
    %v379 = vld [vmem:[#allocation7 + $0x360] sm:$0xff]
    %v380 = vld [vmem:[#allocation7 + $0x368] sm:$0xff]
    %v381 = vld [vmem:[#allocation7 + $0x370] sm:$0xff]
    %v382 = vld [vmem:[#allocation7 + $0x378] sm:$0xff]
    %v383 = vld [vmem:[#allocation7 + $0x380] sm:$0xff]
    %v384 = vld [vmem:[#allocation7 + $0x388] sm:$0xff]
    %v385 = vld [vmem:[#allocation7 + $0x390] sm:$0xff]
    %v386 = vld [vmem:[#allocation7 + $0x398] sm:$0xff]
    %v387 = vld [vmem:[#allocation7 + $0x3a0] sm:$0xff]
    %v388 = vld [vmem:[#allocation7 + $0x3a8] sm:$0xff]
    %v389 = vld [vmem:[#allocation7 + $0x3b0] sm:$0xff]
    %v390 = vld [vmem:[#allocation7 + $0x3b8] sm:$0xff]
    %v391 = vld [vmem:[#allocation7 + $0x3c0] sm:$0xff]
    %v392 = vld [vmem:[#allocation7 + $0x3c8] sm:$0xff]
    %v393 = vld [vmem:[#allocation7 + $0x3d0] sm:$0xff]
    %v394 = vld [vmem:[#allocation7 + $0x3d8] sm:$0xff]
    %v395 = vld [vmem:[#allocation7 + $0x3e0] sm:$0xff]
    %v396 = vld [vmem:[#allocation7 + $0x3e8] sm:$0xff]
    %v397 = vld [vmem:[#allocation7 + $0x3f0] sm:$0xff]
    %v398 = vld [vmem:[#allocation7 + $0x3f8] sm:$0xff]
    %v399 = vld [vmem:[%s4] sm:$0xf]
    %v401 = vlaneseq
    %v402 = vshrl.u32 %v401, 7
    %v403 = vsub.s32 0, %v402
    %v404 = vrot.slane %v399, %v403
    %v405 = vlaneseq
    %v406 = vshrl.u32 %v405, 7
    %v407 = vsub.s32 1, %v406
    %v408 = vrot.slane %v399, %v407
    %v409 = vlaneseq
    %v410 = vshrl.u32 %v409, 7
    %v411 = vsub.s32 2, %v410
    %v412 = vrot.slane %v399, %v411
    %v413 = vlaneseq
    %v414 = vshrl.u32 %v413, 7
    %v415 = vsub.s32 3, %v414
    %v416 = vrot.slane %v399, %v415
    %v549 = vunpack.c.l.b16 %v271
    %v550 = vunpack.c.h.b16 %v271
    %v551 = vunpack.c.l.b16 %v272
    %v552 = vunpack.c.h.b16 %v272
    %v553 = vunpack.c.l.b16 %v273
    %v554 = vunpack.c.h.b16 %v273
    %v555 = vunpack.c.l.b16 %v274
    %v556 = vunpack.c.h.b16 %v274
    %v557 = vunpack.c.l.b16 %v275
    %v558 = vunpack.c.h.b16 %v275
    %v559 = vunpack.c.l.b16 %v276
    %v560 = vunpack.c.h.b16 %v276
    %v561 = vunpack.c.l.b16 %v277
    %v562 = vunpack.c.h.b16 %v277
    %v563 = vunpack.c.l.b16 %v278
    %v564 = vunpack.c.h.b16 %v278
    %v565 = vunpack.c.l.b16 %v279
    %v566 = vunpack.c.h.b16 %v279
    %v567 = vunpack.c.l.b16 %v280
    %v568 = vunpack.c.h.b16 %v280
    %v569 = vunpack.c.l.b16 %v281
    %v570 = vunpack.c.h.b16 %v281
    %v571 = vunpack.c.l.b16 %v282
    %v572 = vunpack.c.h.b16 %v282
    %v573 = vunpack.c.l.b16 %v283
    %v574 = vunpack.c.h.b16 %v283
    %v575 = vunpack.c.l.b16 %v284
    %v576 = vunpack.c.h.b16 %v284
    %v577 = vunpack.c.l.b16 %v285
    %v578 = vunpack.c.h.b16 %v285
    %v579 = vunpack.c.l.b16 %v286
    %v580 = vunpack.c.h.b16 %v286
    %v581 = vunpack.c.l.b16 %v287
    %v582 = vunpack.c.h.b16 %v287
    %v583 = vunpack.c.l.b16 %v288
    %v584 = vunpack.c.h.b16 %v288
    %v585 = vunpack.c.l.b16 %v289
    %v586 = vunpack.c.h.b16 %v289
    %v587 = vunpack.c.l.b16 %v290
    %v588 = vunpack.c.h.b16 %v290
    %v589 = vunpack.c.l.b16 %v291
    %v590 = vunpack.c.h.b16 %v291
    %v591 = vunpack.c.l.b16 %v292
    %v592 = vunpack.c.h.b16 %v292
    %v593 = vunpack.c.l.b16 %v293
    %v594 = vunpack.c.h.b16 %v293
    %v595 = vunpack.c.l.b16 %v294
    %v596 = vunpack.c.h.b16 %v294
    %v597 = vunpack.c.l.b16 %v295
    %v598 = vunpack.c.h.b16 %v295
    %v599 = vunpack.c.l.b16 %v296
    %v600 = vunpack.c.h.b16 %v296
    %v601 = vunpack.c.l.b16 %v297
    %v602 = vunpack.c.h.b16 %v297
    %v603 = vunpack.c.l.b16 %v298
    %v604 = vunpack.c.h.b16 %v298
    %v605 = vunpack.c.l.b16 %v299
    %v606 = vunpack.c.h.b16 %v299
    %v607 = vunpack.c.l.b16 %v300
    %v608 = vunpack.c.h.b16 %v300
    %v609 = vunpack.c.l.b16 %v301
    %v610 = vunpack.c.h.b16 %v301
    %v611 = vunpack.c.l.b16 %v302
    %v612 = vunpack.c.h.b16 %v302
    %v613 = vunpack.c.l.b16 %v303
    %v614 = vunpack.c.h.b16 %v303
    %v615 = vunpack.c.l.b16 %v304
    %v616 = vunpack.c.h.b16 %v304
    %v617 = vunpack.c.l.b16 %v305
    %v618 = vunpack.c.h.b16 %v305
    %v619 = vunpack.c.l.b16 %v306
    %v620 = vunpack.c.h.b16 %v306
    %v621 = vunpack.c.l.b16 %v307
    %v622 = vunpack.c.h.b16 %v307
    %v623 = vunpack.c.l.b16 %v308
    %v624 = vunpack.c.h.b16 %v308
    %v625 = vunpack.c.l.b16 %v309
    %v626 = vunpack.c.h.b16 %v309
    %v627 = vunpack.c.l.b16 %v310
    %v628 = vunpack.c.h.b16 %v310
    %v629 = vunpack.c.l.b16 %v311
    %v630 = vunpack.c.h.b16 %v311
    %v631 = vunpack.c.l.b16 %v312
    %v632 = vunpack.c.h.b16 %v312
    %v633 = vunpack.c.l.b16 %v313
    %v634 = vunpack.c.h.b16 %v313
    %v635 = vunpack.c.l.b16 %v314
    %v636 = vunpack.c.h.b16 %v314
    %v637 = vunpack.c.l.b16 %v315
    %v638 = vunpack.c.h.b16 %v315
    %v639 = vunpack.c.l.b16 %v316
    %v640 = vunpack.c.h.b16 %v316
    %v641 = vunpack.c.l.b16 %v317
    %v642 = vunpack.c.h.b16 %v317
    %v643 = vunpack.c.l.b16 %v318
    %v644 = vunpack.c.h.b16 %v318
    %v645 = vunpack.c.l.b16 %v319
    %v646 = vunpack.c.h.b16 %v319
    %v647 = vunpack.c.l.b16 %v320
    %v648 = vunpack.c.h.b16 %v320
    %v649 = vunpack.c.l.b16 %v321
    %v650 = vunpack.c.h.b16 %v321
    %v651 = vunpack.c.l.b16 %v322
    %v652 = vunpack.c.h.b16 %v322
    %v653 = vunpack.c.l.b16 %v323
    %v654 = vunpack.c.h.b16 %v323
    %v655 = vunpack.c.l.b16 %v324
    %v656 = vunpack.c.h.b16 %v324
    %v657 = vunpack.c.l.b16 %v325
    %v658 = vunpack.c.h.b16 %v325
    %v659 = vunpack.c.l.b16 %v326
    %v660 = vunpack.c.h.b16 %v326
    %v661 = vunpack.c.l.b16 %v327
    %v662 = vunpack.c.h.b16 %v327
    %v663 = vunpack.c.l.b16 %v328
    %v664 = vunpack.c.h.b16 %v328
    %v665 = vunpack.c.l.b16 %v329
    %v666 = vunpack.c.h.b16 %v329
    %v667 = vunpack.c.l.b16 %v330
    %v668 = vunpack.c.h.b16 %v330
    %v669 = vunpack.c.l.b16 %v331
    %v670 = vunpack.c.h.b16 %v331
    %v671 = vunpack.c.l.b16 %v332
    %v672 = vunpack.c.h.b16 %v332
    %v673 = vunpack.c.l.b16 %v333
    %v674 = vunpack.c.h.b16 %v333
    %v675 = vunpack.c.l.b16 %v334
    %v676 = vunpack.c.h.b16 %v334
    %v677 = vunpack.c.l.b16 %v335
    %v678 = vunpack.c.h.b16 %v335
    %v679 = vunpack.c.l.b16 %v336
    %v680 = vunpack.c.h.b16 %v336
    %v681 = vunpack.c.l.b16 %v337
    %v682 = vunpack.c.h.b16 %v337
    %v683 = vunpack.c.l.b16 %v338
    %v684 = vunpack.c.h.b16 %v338
    %v685 = vunpack.c.l.b16 %v339
    %v686 = vunpack.c.h.b16 %v339
    %v687 = vunpack.c.l.b16 %v340
    %v688 = vunpack.c.h.b16 %v340
    %v689 = vunpack.c.l.b16 %v341
    %v690 = vunpack.c.h.b16 %v341
    %v691 = vunpack.c.l.b16 %v342
    %v692 = vunpack.c.h.b16 %v342
    %v693 = vunpack.c.l.b16 %v343
    %v694 = vunpack.c.h.b16 %v343
    %v695 = vunpack.c.l.b16 %v344
    %v696 = vunpack.c.h.b16 %v344
    %v697 = vunpack.c.l.b16 %v345
    %v698 = vunpack.c.h.b16 %v345
    %v699 = vunpack.c.l.b16 %v346
    %v700 = vunpack.c.h.b16 %v346
    %v701 = vunpack.c.l.b16 %v347
    %v702 = vunpack.c.h.b16 %v347
    %v703 = vunpack.c.l.b16 %v348
    %v704 = vunpack.c.h.b16 %v348
    %v705 = vunpack.c.l.b16 %v349
    %v706 = vunpack.c.h.b16 %v349
    %v707 = vunpack.c.l.b16 %v350
    %v708 = vunpack.c.h.b16 %v350
    %v709 = vunpack.c.l.b16 %v351
    %v710 = vunpack.c.h.b16 %v351
    %v711 = vunpack.c.l.b16 %v352
    %v712 = vunpack.c.h.b16 %v352
    %v713 = vunpack.c.l.b16 %v353
    %v714 = vunpack.c.h.b16 %v353
    %v715 = vunpack.c.l.b16 %v354
    %v716 = vunpack.c.h.b16 %v354
    %v717 = vunpack.c.l.b16 %v355
    %v718 = vunpack.c.h.b16 %v355
    %v719 = vunpack.c.l.b16 %v356
    %v720 = vunpack.c.h.b16 %v356
    %v721 = vunpack.c.l.b16 %v357
    %v722 = vunpack.c.h.b16 %v357
    %v723 = vunpack.c.l.b16 %v358
    %v724 = vunpack.c.h.b16 %v358
    %v725 = vunpack.c.l.b16 %v359
    %v726 = vunpack.c.h.b16 %v359
    %v727 = vunpack.c.l.b16 %v360
    %v728 = vunpack.c.h.b16 %v360
    %v729 = vunpack.c.l.b16 %v361
    %v730 = vunpack.c.h.b16 %v361
    %v731 = vunpack.c.l.b16 %v362
    %v732 = vunpack.c.h.b16 %v362
    %v733 = vunpack.c.l.b16 %v363
    %v734 = vunpack.c.h.b16 %v363
    %v735 = vunpack.c.l.b16 %v364
    %v736 = vunpack.c.h.b16 %v364
    %v737 = vunpack.c.l.b16 %v365
    %v738 = vunpack.c.h.b16 %v365
    %v739 = vunpack.c.l.b16 %v366
    %v740 = vunpack.c.h.b16 %v366
    %v741 = vunpack.c.l.b16 %v367
    %v742 = vunpack.c.h.b16 %v367
    %v743 = vunpack.c.l.b16 %v368
    %v744 = vunpack.c.h.b16 %v368
    %v745 = vunpack.c.l.b16 %v369
    %v746 = vunpack.c.h.b16 %v369
    %v747 = vunpack.c.l.b16 %v370
    %v748 = vunpack.c.h.b16 %v370
    %v749 = vunpack.c.l.b16 %v371
    %v750 = vunpack.c.h.b16 %v371
    %v751 = vunpack.c.l.b16 %v372
    %v752 = vunpack.c.h.b16 %v372
    %v753 = vunpack.c.l.b16 %v373
    %v754 = vunpack.c.h.b16 %v373
    %v755 = vunpack.c.l.b16 %v374
    %v756 = vunpack.c.h.b16 %v374
    %v757 = vunpack.c.l.b16 %v375
    %v758 = vunpack.c.h.b16 %v375
    %v759 = vunpack.c.l.b16 %v376
    %v760 = vunpack.c.h.b16 %v376
    %v761 = vunpack.c.l.b16 %v377
    %v762 = vunpack.c.h.b16 %v377
    %v763 = vunpack.c.l.b16 %v378
    %v764 = vunpack.c.h.b16 %v378
    %v765 = vunpack.c.l.b16 %v379
    %v766 = vunpack.c.h.b16 %v379
    %v767 = vunpack.c.l.b16 %v380
    %v768 = vunpack.c.h.b16 %v380
    %v769 = vunpack.c.l.b16 %v381
    %v770 = vunpack.c.h.b16 %v381
    %v771 = vunpack.c.l.b16 %v382
    %v772 = vunpack.c.h.b16 %v382
    %v773 = vunpack.c.l.b16 %v383
    %v774 = vunpack.c.h.b16 %v383
    %v775 = vunpack.c.l.b16 %v384
    %v776 = vunpack.c.h.b16 %v384
    %v777 = vunpack.c.l.b16 %v385
    %v778 = vunpack.c.h.b16 %v385
    %v779 = vunpack.c.l.b16 %v386
    %v780 = vunpack.c.h.b16 %v386
    %v781 = vunpack.c.l.b16 %v387
    %v782 = vunpack.c.h.b16 %v387
    %v783 = vunpack.c.l.b16 %v388
    %v784 = vunpack.c.h.b16 %v388
    %v785 = vunpack.c.l.b16 %v389
    %v786 = vunpack.c.h.b16 %v389
    %v787 = vunpack.c.l.b16 %v390
    %v788 = vunpack.c.h.b16 %v390
    %v789 = vunpack.c.l.b16 %v391
    %v790 = vunpack.c.h.b16 %v391
    %v791 = vunpack.c.l.b16 %v392
    %v792 = vunpack.c.h.b16 %v392
    %v793 = vunpack.c.l.b16 %v393
    %v794 = vunpack.c.h.b16 %v393
    %v795 = vunpack.c.l.b16 %v394
    %v796 = vunpack.c.h.b16 %v394
    %v797 = vunpack.c.l.b16 %v395
    %v798 = vunpack.c.h.b16 %v395
    %v799 = vunpack.c.l.b16 %v396
    %v800 = vunpack.c.h.b16 %v396
    %v801 = vunpack.c.l.b16 %v397
    %v802 = vunpack.c.h.b16 %v397
    %v803 = vunpack.c.l.b16 %v398
    %v804 = vunpack.c.h.b16 %v398
    %v805 = vpack.c.b16 %v553, %v549
    %v806 = vpack.c.b16 %v554, %v550
    %v807 = vpack.c.b16 %v555, %v551
    %v808 = vpack.c.b16 %v556, %v552
    %v809 = vpack.c.b16 %v561, %v557
    %v810 = vpack.c.b16 %v562, %v558
    %v811 = vpack.c.b16 %v563, %v559
    %v812 = vpack.c.b16 %v564, %v560
    %v813 = vpack.c.b16 %v569, %v565
    %v814 = vpack.c.b16 %v570, %v566
    %v815 = vpack.c.b16 %v571, %v567
    %v816 = vpack.c.b16 %v572, %v568
    %v817 = vpack.c.b16 %v577, %v573
    %v818 = vpack.c.b16 %v578, %v574
    %v819 = vpack.c.b16 %v579, %v575
    %v820 = vpack.c.b16 %v580, %v576
    %v821 = vpack.c.b16 %v585, %v581
    %v822 = vpack.c.b16 %v586, %v582
    %v823 = vpack.c.b16 %v587, %v583
    %v824 = vpack.c.b16 %v588, %v584
    %v825 = vpack.c.b16 %v593, %v589
    %v826 = vpack.c.b16 %v594, %v590
    %v827 = vpack.c.b16 %v595, %v591
    %v828 = vpack.c.b16 %v596, %v592
    %v829 = vpack.c.b16 %v601, %v597
    %v830 = vpack.c.b16 %v602, %v598
    %v831 = vpack.c.b16 %v603, %v599
    %v832 = vpack.c.b16 %v604, %v600
    %v833 = vpack.c.b16 %v609, %v605
    %v834 = vpack.c.b16 %v610, %v606
    %v835 = vpack.c.b16 %v611, %v607
    %v836 = vpack.c.b16 %v612, %v608
    %v837 = vpack.c.b16 %v617, %v613
    %v838 = vpack.c.b16 %v618, %v614
    %v839 = vpack.c.b16 %v619, %v615
    %v840 = vpack.c.b16 %v620, %v616
    %v841 = vpack.c.b16 %v625, %v621
    %v842 = vpack.c.b16 %v626, %v622
    %v843 = vpack.c.b16 %v627, %v623
    %v844 = vpack.c.b16 %v628, %v624
    %v845 = vpack.c.b16 %v633, %v629
    %v846 = vpack.c.b16 %v634, %v630
    %v847 = vpack.c.b16 %v635, %v631
    %v848 = vpack.c.b16 %v636, %v632
    %v849 = vpack.c.b16 %v641, %v637
    %v850 = vpack.c.b16 %v642, %v638
    %v851 = vpack.c.b16 %v643, %v639
    %v852 = vpack.c.b16 %v644, %v640
    %v853 = vpack.c.b16 %v649, %v645
    %v854 = vpack.c.b16 %v650, %v646
    %v855 = vpack.c.b16 %v651, %v647
    %v856 = vpack.c.b16 %v652, %v648
    %v857 = vpack.c.b16 %v657, %v653
    %v858 = vpack.c.b16 %v658, %v654
    %v859 = vpack.c.b16 %v659, %v655
    %v860 = vpack.c.b16 %v660, %v656
    %v861 = vpack.c.b16 %v665, %v661
    %v862 = vpack.c.b16 %v666, %v662
    %v863 = vpack.c.b16 %v667, %v663
    %v864 = vpack.c.b16 %v668, %v664
    %v865 = vpack.c.b16 %v673, %v669
    %v866 = vpack.c.b16 %v674, %v670
    %v867 = vpack.c.b16 %v675, %v671
    %v868 = vpack.c.b16 %v676, %v672
    %v869 = vpack.c.b16 %v681, %v677
    %v870 = vpack.c.b16 %v682, %v678
    %v871 = vpack.c.b16 %v683, %v679
    %v872 = vpack.c.b16 %v684, %v680
    %v873 = vpack.c.b16 %v689, %v685
    %v874 = vpack.c.b16 %v690, %v686
    %v875 = vpack.c.b16 %v691, %v687
    %v876 = vpack.c.b16 %v692, %v688
    %v877 = vpack.c.b16 %v697, %v693
    %v878 = vpack.c.b16 %v698, %v694
    %v879 = vpack.c.b16 %v699, %v695
    %v880 = vpack.c.b16 %v700, %v696
    %v881 = vpack.c.b16 %v705, %v701
    %v882 = vpack.c.b16 %v706, %v702
    %v883 = vpack.c.b16 %v707, %v703
    %v884 = vpack.c.b16 %v708, %v704
    %v885 = vpack.c.b16 %v713, %v709
    %v886 = vpack.c.b16 %v714, %v710
    %v887 = vpack.c.b16 %v715, %v711
    %v888 = vpack.c.b16 %v716, %v712
    %v889 = vpack.c.b16 %v721, %v717
    %v890 = vpack.c.b16 %v722, %v718
    %v891 = vpack.c.b16 %v723, %v719
    %v892 = vpack.c.b16 %v724, %v720
    %v893 = vpack.c.b16 %v729, %v725
    %v894 = vpack.c.b16 %v730, %v726
    %v895 = vpack.c.b16 %v731, %v727
    %v896 = vpack.c.b16 %v732, %v728
    %v897 = vpack.c.b16 %v737, %v733
    %v898 = vpack.c.b16 %v738, %v734
    %v899 = vpack.c.b16 %v739, %v735
    %v900 = vpack.c.b16 %v740, %v736
    %v901 = vpack.c.b16 %v745, %v741
    %v902 = vpack.c.b16 %v746, %v742
    %v903 = vpack.c.b16 %v747, %v743
    %v904 = vpack.c.b16 %v748, %v744
    %v905 = vpack.c.b16 %v753, %v749
    %v906 = vpack.c.b16 %v754, %v750
    %v907 = vpack.c.b16 %v755, %v751
    %v908 = vpack.c.b16 %v756, %v752
    %v909 = vpack.c.b16 %v761, %v757
    %v910 = vpack.c.b16 %v762, %v758
    %v911 = vpack.c.b16 %v763, %v759
    %v912 = vpack.c.b16 %v764, %v760
    %v913 = vpack.c.b16 %v769, %v765
    %v914 = vpack.c.b16 %v770, %v766
    %v915 = vpack.c.b16 %v771, %v767
    %v916 = vpack.c.b16 %v772, %v768
    %v917 = vpack.c.b16 %v777, %v773
    %v918 = vpack.c.b16 %v778, %v774
    %v919 = vpack.c.b16 %v779, %v775
    %v920 = vpack.c.b16 %v780, %v776
    %v921 = vpack.c.b16 %v785, %v781
    %v922 = vpack.c.b16 %v786, %v782
    %v923 = vpack.c.b16 %v787, %v783
    %v924 = vpack.c.b16 %v788, %v784
    %v925 = vpack.c.b16 %v793, %v789
    %v926 = vpack.c.b16 %v794, %v790
    %v927 = vpack.c.b16 %v795, %v791
    %v928 = vpack.c.b16 %v796, %v792
    %v929 = vpack.c.b16 %v801, %v797
    %v930 = vpack.c.b16 %v802, %v798
    %v931 = vpack.c.b16 %v803, %v799
    %v932 = vpack.c.b16 %v804, %v800
    %1061 = vmatprep.subr.bf16.mxu0 %v806
    %1062 = vmatpush1.bf16.msra.mxu0 %v805
    %1063 = vmatprep.subr.bf16.mxu0 %v810
    %1064 = vmatpush1.bf16.msra.mxu0 %v809
    %1065 = vmatprep.subr.bf16.mxu0 %v814
    %1066 = vmatpush1.bf16.msra.mxu0 %v813
    %1067 = vmatprep.subr.bf16.mxu0 %v818
    %1068 = vmatpush1.bf16.msra.mxu0 %v817
    %1069 = vmatprep.subr.bf16.mxu0 %v822
    %1070 = vmatpush1.bf16.msra.mxu0 %v821
    %1071 = vmatprep.subr.bf16.mxu0 %v826
    %1072 = vmatpush1.bf16.msra.mxu0 %v825
    %1073 = vmatprep.subr.bf16.mxu0 %v830
    %1074 = vmatpush1.bf16.msra.mxu0 %v829
    %1075 = vmatprep.subr.bf16.mxu0 %v834
    %1076 = vmatpush1.bf16.msra.mxu0 %v833
    %1077 = vmatprep.subr.bf16.mxu0 %v838
    %1078 = vmatpush1.bf16.msra.mxu0 %v837
    %1079 = vmatprep.subr.bf16.mxu0 %v842
    %1080 = vmatpush1.bf16.msra.mxu0 %v841
    %1081 = vmatprep.subr.bf16.mxu0 %v846
    %1082 = vmatpush1.bf16.msra.mxu0 %v845
    %1083 = vmatprep.subr.bf16.mxu0 %v850
    %1084 = vmatpush1.bf16.msra.mxu0 %v849
    %1085 = vmatprep.subr.bf16.mxu0 %v854
    %1086 = vmatpush1.bf16.msra.mxu0 %v853
    %1087 = vmatprep.subr.bf16.mxu0 %v858
    %1088 = vmatpush1.bf16.msra.mxu0 %v857
    %1089 = vmatprep.subr.bf16.mxu0 %v862
    %1090 = vmatpush1.bf16.msra.mxu0 %v861
    %1091 = vmatprep.subr.bf16.mxu0 %v866
    %1092 = vmatpush1.bf16.msra.mxu0 %v865
    %1093 = vmatprep.mubr.bf16.mxu0 %v268
    %1094 = vmatmul.mubr.bf16.gmra.mrb[0].mxu0 %v267
    %v1095 = vpop.f32.mrb[0].mxu0
    %v1096 = vadd.f32 %v404, %v1095
    %v1097 = vpop.f32.mrb[0].mxu0
    %v1098 = vadd.f32 %v408, %v1097
    %v1099 = vpop.f32.mrb[0].mxu0
    %v1100 = vpop.f32.mrb[0].mxu0
    %1101 = vdwg.mxu0
    %1102 = vmatprep.subr.bf16.mxu0 %v870
    %1103 = vmatpush1.bf16.msra.mxu0 %v869
    %1104 = vmatprep.subr.bf16.mxu0 %v874
    %1105 = vmatpush1.bf16.msra.mxu0 %v873
    %1106 = vmatprep.subr.bf16.mxu0 %v878
    %1107 = vmatpush1.bf16.msra.mxu0 %v877
    %1108 = vmatprep.subr.bf16.mxu0 %v882
    %1109 = vmatpush1.bf16.msra.mxu0 %v881
    %1110 = vmatprep.subr.bf16.mxu0 %v886
    %1111 = vmatpush1.bf16.msra.mxu0 %v885
    %1112 = vmatprep.subr.bf16.mxu0 %v890
    %1113 = vmatpush1.bf16.msra.mxu0 %v889
    %1114 = vmatprep.subr.bf16.mxu0 %v894
    %1115 = vmatpush1.bf16.msra.mxu0 %v893
    %1116 = vmatprep.subr.bf16.mxu0 %v898
    %1117 = vmatpush1.bf16.msra.mxu0 %v897
    %1118 = vmatprep.subr.bf16.mxu0 %v902
    %1119 = vmatpush1.bf16.msra.mxu0 %v901
    %1120 = vmatprep.subr.bf16.mxu0 %v906
    %1121 = vmatpush1.bf16.msra.mxu0 %v905
    %1122 = vmatprep.subr.bf16.mxu0 %v910
    %1123 = vmatpush1.bf16.msra.mxu0 %v909
    %1124 = vmatprep.subr.bf16.mxu0 %v914
    %1125 = vmatpush1.bf16.msra.mxu0 %v913
    %1126 = vmatprep.subr.bf16.mxu0 %v918
    %1127 = vmatpush1.bf16.msra.mxu0 %v917
    %1128 = vmatprep.subr.bf16.mxu0 %v922
    %1129 = vmatpush1.bf16.msra.mxu0 %v921
    %1130 = vmatprep.subr.bf16.mxu0 %v926
    %1131 = vmatpush1.bf16.msra.mxu0 %v925
    %1132 = vmatprep.subr.bf16.mxu0 %v930
    %1133 = vmatpush1.bf16.msra.mxu0 %v929
    %1134 = vmatprep.mubr.bf16.mxu0 %v270
    %1135 = vmatmul.mubr.bf16.gmra.mrb[0].mxu0 %v269
    %v1136 = vpop.f32.mrb[0].mxu0
    %v1137 = vadd.f32 %v1096, %v1136
    %v1138 = vpop.f32.mrb[0].mxu0
    %v1139 = vadd.f32 %v1098, %v1138
    %v1140 = vpop.f32.mrb[0].mxu0
    %v1141 = vpop.f32.mrb[0].mxu0
    %1142 = vdwg.mxu0
    %1143 = vmatprep.subr.bf16.mxu0 %v808
    %1144 = vmatpush1.bf16.msra.mxu0 %v807
    %1145 = vmatprep.subr.bf16.mxu0 %v812
    %1146 = vmatpush1.bf16.msra.mxu0 %v811
    %1147 = vmatprep.subr.bf16.mxu0 %v816
    %1148 = vmatpush1.bf16.msra.mxu0 %v815
    %1149 = vmatprep.subr.bf16.mxu0 %v820
    %1150 = vmatpush1.bf16.msra.mxu0 %v819
    %1151 = vmatprep.subr.bf16.mxu0 %v824
    %1152 = vmatpush1.bf16.msra.mxu0 %v823
    %1153 = vmatprep.subr.bf16.mxu0 %v828
    %1154 = vmatpush1.bf16.msra.mxu0 %v827
    %1155 = vmatprep.subr.bf16.mxu0 %v832
    %1156 = vmatpush1.bf16.msra.mxu0 %v831
    %1157 = vmatprep.subr.bf16.mxu0 %v836
    %1158 = vmatpush1.bf16.msra.mxu0 %v835
    %1159 = vmatprep.subr.bf16.mxu0 %v840
    %1160 = vmatpush1.bf16.msra.mxu0 %v839
    %1161 = vmatprep.subr.bf16.mxu0 %v844
    %1162 = vmatpush1.bf16.msra.mxu0 %v843
    %1163 = vmatprep.subr.bf16.mxu0 %v848
    %1164 = vmatpush1.bf16.msra.mxu0 %v847
    %1165 = vmatprep.subr.bf16.mxu0 %v852
    %1166 = vmatpush1.bf16.msra.mxu0 %v851
    %1167 = vmatprep.subr.bf16.mxu0 %v856
    %1168 = vmatpush1.bf16.msra.mxu0 %v855
    %1169 = vmatprep.subr.bf16.mxu0 %v860
    %1170 = vmatpush1.bf16.msra.mxu0 %v859
    %1171 = vmatprep.subr.bf16.mxu0 %v864
    %1172 = vmatpush1.bf16.msra.mxu0 %v863
    %1173 = vmatprep.subr.bf16.mxu0 %v868
    %1174 = vmatpush1.bf16.msra.mxu0 %v867
    %1175 = vmatprep.mubr.bf16.mxu0 %v268
    %1176 = vmatmul.mubr.bf16.gmra.mrb[0].mxu0 %v267
    %v1177 = vpop.f32.mrb[0].mxu0
    %v1178 = vadd.f32 %v412, %v1177
    %v1179 = vpop.f32.mrb[0].mxu0
    %v1180 = vadd.f32 %v416, %v1179
    %v1181 = vpop.f32.mrb[0].mxu0
    %v1182 = vpop.f32.mrb[0].mxu0
    %1183 = vdwg.mxu0
    %1184 = vmatprep.subr.bf16.mxu0 %v872
    %1185 = vmatpush1.bf16.msra.mxu0 %v871
    %1186 = vmatprep.subr.bf16.mxu0 %v876
    %1187 = vmatpush1.bf16.msra.mxu0 %v875
    %1188 = vmatprep.subr.bf16.mxu0 %v880
    %1189 = vmatpush1.bf16.msra.mxu0 %v879
    %1190 = vmatprep.subr.bf16.mxu0 %v884
    %1191 = vmatpush1.bf16.msra.mxu0 %v883
    %1192 = vmatprep.subr.bf16.mxu0 %v888
    %1193 = vmatpush1.bf16.msra.mxu0 %v887
    %1194 = vmatprep.subr.bf16.mxu0 %v892
    %1195 = vmatpush1.bf16.msra.mxu0 %v891
    %1196 = vmatprep.subr.bf16.mxu0 %v896
    %1197 = vmatpush1.bf16.msra.mxu0 %v895
    %1198 = vmatprep.subr.bf16.mxu0 %v900
    %1199 = vmatpush1.bf16.msra.mxu0 %v899
    %1200 = vmatprep.subr.bf16.mxu0 %v904
    %1201 = vmatpush1.bf16.msra.mxu0 %v903
    %1202 = vmatprep.subr.bf16.mxu0 %v908
    %1203 = vmatpush1.bf16.msra.mxu0 %v907
    %1204 = vmatprep.subr.bf16.mxu0 %v912
    %1205 = vmatpush1.bf16.msra.mxu0 %v911
    %1206 = vmatprep.subr.bf16.mxu0 %v916
    %1207 = vmatpush1.bf16.msra.mxu0 %v915
    %1208 = vmatprep.subr.bf16.mxu0 %v920
    %1209 = vmatpush1.bf16.msra.mxu0 %v919
    %1210 = vmatprep.subr.bf16.mxu0 %v924
    %1211 = vmatpush1.bf16.msra.mxu0 %v923
    %1212 = vmatprep.subr.bf16.mxu0 %v928
    %1213 = vmatpush1.bf16.msra.mxu0 %v927
    %1214 = vmatprep.subr.bf16.mxu0 %v932
    %1215 = vmatpush1.bf16.msra.mxu0 %v931
    %1216 = vmatprep.mubr.bf16.mxu0 %v270
    %1217 = vmatmul.mubr.bf16.gmra.mrb[0].mxu0 %v269
    %v1218 = vpop.f32.mrb[0].mxu0
    %v1219 = vadd.f32 %v1178, %v1218
    %v1220 = vpop.f32.mrb[0].mxu0
    %v1221 = vadd.f32 %v1180, %v1220
    %v1222 = vpop.f32.mrb[0].mxu0
    %v1223 = vpop.f32.mrb[0].mxu0
    %1224 = vdwg.mxu0
    %v1225 = vmax.f32 %v1137, 0.0
    %v1226 = vmax.f32 %v1139, 0.0
    %v1227 = vmax.f32 %v1219, 0.0
    %v1228 = vmax.f32 %v1221, 0.0
    %v1229 = vpack.c.bf16 %v1225, %v1225
    %v1230 = vpack.c.bf16 %v1226, %v1226
    %v1231 = vpack.c.bf16 %v1227, %v1227
    %v1232 = vpack.c.bf16 %v1228, %v1228
    %v1233 = vld [vmem:[#allocation8] sm:$0xf]
    %v1234 = vld [vmem:[#allocation8 + $0x4] sm:$0xf]
    %v1235 = vld [vmem:[#allocation8 + $0x8] sm:$0xf]
    %v1236 = vld [vmem:[#allocation8 + $0xc] sm:$0xf]
    %v1237 = vld [vmem:[#allocation8 + $0x10] sm:$0xf]
    %v1238 = vld [vmem:[#allocation8 + $0x14] sm:$0xf]
    %v1239 = vld [vmem:[#allocation8 + $0x18] sm:$0xf]
    %v1240 = vld [vmem:[#allocation8 + $0x1c] sm:$0xf]
    %v1241 = vld [vmem:[#allocation8 + $0x20] sm:$0xf]
    %v1242 = vld [vmem:[#allocation8 + $0x24] sm:$0xf]
    %v1243 = vld [vmem:[#allocation8 + $0x28] sm:$0xf]
    %v1244 = vld [vmem:[#allocation8 + $0x2c] sm:$0xf]
    %v1245 = vld [vmem:[#allocation8 + $0x30] sm:$0xf]
    %v1246 = vld [vmem:[#allocation8 + $0x34] sm:$0xf]
    %v1247 = vld [vmem:[#allocation8 + $0x38] sm:$0xf]
    %v1248 = vld [vmem:[#allocation8 + $0x3c] sm:$0xf]
    %v1249 = vld [vmem:[#allocation8 + $0x40] sm:$0xf]
    %v1250 = vld [vmem:[#allocation8 + $0x44] sm:$0xf]
    %v1251 = vld [vmem:[#allocation8 + $0x48] sm:$0xf]
    %v1252 = vld [vmem:[#allocation8 + $0x4c] sm:$0xf]
    %v1253 = vld [vmem:[#allocation8 + $0x50] sm:$0xf]
    %v1254 = vld [vmem:[#allocation8 + $0x54] sm:$0xf]
    %v1255 = vld [vmem:[#allocation8 + $0x58] sm:$0xf]
    %v1256 = vld [vmem:[#allocation8 + $0x5c] sm:$0xf]
    %v1257 = vld [vmem:[#allocation8 + $0x60] sm:$0xf]
    %v1258 = vld [vmem:[#allocation8 + $0x64] sm:$0xf]
    %v1259 = vld [vmem:[#allocation8 + $0x68] sm:$0xf]
    %v1260 = vld [vmem:[#allocation8 + $0x6c] sm:$0xf]
    %v1261 = vld [vmem:[#allocation8 + $0x70] sm:$0xf]
    %v1262 = vld [vmem:[#allocation8 + $0x74] sm:$0xf]
    %v1263 = vld [vmem:[#allocation8 + $0x78] sm:$0xf]
    %v1264 = vld [vmem:[#allocation8 + $0x7c] sm:$0xf]
    %v1265 = vld [vmem:[#allocation8 + $0x80] sm:$0xf]
    %v1266 = vld [vmem:[#allocation8 + $0x84] sm:$0xf]
    %v1267 = vld [vmem:[#allocation8 + $0x88] sm:$0xf]
    %v1268 = vld [vmem:[#allocation8 + $0x8c] sm:$0xf]
    %v1269 = vld [vmem:[#allocation8 + $0x90] sm:$0xf]
    %v1270 = vld [vmem:[#allocation8 + $0x94] sm:$0xf]
    %v1271 = vld [vmem:[#allocation8 + $0x98] sm:$0xf]
    %v1272 = vld [vmem:[#allocation8 + $0x9c] sm:$0xf]
    %v1273 = vld [vmem:[#allocation8 + $0xa0] sm:$0xf]
    %v1274 = vld [vmem:[#allocation8 + $0xa4] sm:$0xf]
    %v1275 = vld [vmem:[#allocation8 + $0xa8] sm:$0xf]
    %v1276 = vld [vmem:[#allocation8 + $0xac] sm:$0xf]
    %v1277 = vld [vmem:[#allocation8 + $0xb0] sm:$0xf]
    %v1278 = vld [vmem:[#allocation8 + $0xb4] sm:$0xf]
    %v1279 = vld [vmem:[#allocation8 + $0xb8] sm:$0xf]
    %v1280 = vld [vmem:[#allocation8 + $0xbc] sm:$0xf]
    %v1281 = vld [vmem:[#allocation8 + $0xc0] sm:$0xf]
    %v1282 = vld [vmem:[#allocation8 + $0xc4] sm:$0xf]
    %v1283 = vld [vmem:[#allocation8 + $0xc8] sm:$0xf]
    %v1284 = vld [vmem:[#allocation8 + $0xcc] sm:$0xf]
    %v1285 = vld [vmem:[#allocation8 + $0xd0] sm:$0xf]
    %v1286 = vld [vmem:[#allocation8 + $0xd4] sm:$0xf]
    %v1287 = vld [vmem:[#allocation8 + $0xd8] sm:$0xf]
    %v1288 = vld [vmem:[#allocation8 + $0xdc] sm:$0xf]
    %v1289 = vld [vmem:[#allocation8 + $0xe0] sm:$0xf]
    %v1290 = vld [vmem:[#allocation8 + $0xe4] sm:$0xf]
    %v1291 = vld [vmem:[#allocation8 + $0xe8] sm:$0xf]
    %v1292 = vld [vmem:[#allocation8 + $0xec] sm:$0xf]
    %v1293 = vld [vmem:[#allocation8 + $0xf0] sm:$0xf]
    %v1294 = vld [vmem:[#allocation8 + $0xf4] sm:$0xf]
    %v1295 = vld [vmem:[#allocation8 + $0xf8] sm:$0xf]
    %v1296 = vld [vmem:[#allocation8 + $0xfc] sm:$0xf]
    %v1297 = vld [vmem:[%s6] sm:$0x1]
    %v1299 = vlaneseq
    %v1300 = vshrl.u32 %v1299, 7
    %v1301 = vsub.s32 0, %v1300
    %v1302 = vrot.slane %v1297, %v1301
    %v1368 = vunpack.c.l.b16 %v1233
    %v1369 = vunpack.c.l.b16 %v1234
    %v1370 = vunpack.c.l.b16 %v1235
    %v1371 = vunpack.c.l.b16 %v1236
    %v1372 = vunpack.c.l.b16 %v1237
    %v1373 = vunpack.c.l.b16 %v1238
    %v1374 = vunpack.c.l.b16 %v1239
    %v1375 = vunpack.c.l.b16 %v1240
    %v1376 = vunpack.c.l.b16 %v1241
    %v1377 = vunpack.c.l.b16 %v1242
    %v1378 = vunpack.c.l.b16 %v1243
    %v1379 = vunpack.c.l.b16 %v1244
    %v1380 = vunpack.c.l.b16 %v1245
    %v1381 = vunpack.c.l.b16 %v1246
    %v1382 = vunpack.c.l.b16 %v1247
    %v1383 = vunpack.c.l.b16 %v1248
    %v1384 = vunpack.c.l.b16 %v1249
    %v1385 = vunpack.c.l.b16 %v1250
    %v1386 = vunpack.c.l.b16 %v1251
    %v1387 = vunpack.c.l.b16 %v1252
    %v1388 = vunpack.c.l.b16 %v1253
    %v1389 = vunpack.c.l.b16 %v1254
    %v1390 = vunpack.c.l.b16 %v1255
    %v1391 = vunpack.c.l.b16 %v1256
    %v1392 = vunpack.c.l.b16 %v1257
    %v1393 = vunpack.c.l.b16 %v1258
    %v1394 = vunpack.c.l.b16 %v1259
    %v1395 = vunpack.c.l.b16 %v1260
    %v1396 = vunpack.c.l.b16 %v1261
    %v1397 = vunpack.c.l.b16 %v1262
    %v1398 = vunpack.c.l.b16 %v1263
    %v1399 = vunpack.c.l.b16 %v1264
    %v1400 = vunpack.c.l.b16 %v1265
    %v1401 = vunpack.c.l.b16 %v1266
    %v1402 = vunpack.c.l.b16 %v1267
    %v1403 = vunpack.c.l.b16 %v1268
    %v1404 = vunpack.c.l.b16 %v1269
    %v1405 = vunpack.c.l.b16 %v1270
    %v1406 = vunpack.c.l.b16 %v1271
    %v1407 = vunpack.c.l.b16 %v1272
    %v1408 = vunpack.c.l.b16 %v1273
    %v1409 = vunpack.c.l.b16 %v1274
    %v1410 = vunpack.c.l.b16 %v1275
    %v1411 = vunpack.c.l.b16 %v1276
    %v1412 = vunpack.c.l.b16 %v1277
    %v1413 = vunpack.c.l.b16 %v1278
    %v1414 = vunpack.c.l.b16 %v1279
    %v1415 = vunpack.c.l.b16 %v1280
    %v1416 = vunpack.c.l.b16 %v1281
    %v1417 = vunpack.c.l.b16 %v1282
    %v1418 = vunpack.c.l.b16 %v1283
    %v1419 = vunpack.c.l.b16 %v1284
    %v1420 = vunpack.c.l.b16 %v1285
    %v1421 = vunpack.c.l.b16 %v1286
    %v1422 = vunpack.c.l.b16 %v1287
    %v1423 = vunpack.c.l.b16 %v1288
    %v1424 = vunpack.c.l.b16 %v1289
    %v1425 = vunpack.c.l.b16 %v1290
    %v1426 = vunpack.c.l.b16 %v1291
    %v1427 = vunpack.c.l.b16 %v1292
    %v1428 = vunpack.c.l.b16 %v1293
    %v1429 = vunpack.c.l.b16 %v1294
    %v1430 = vunpack.c.l.b16 %v1295
    %v1431 = vunpack.c.l.b16 %v1296
    %v1432 = vpack.c.b16 %v1369, %v1368
    %v1433 = vpack.c.b16 %v1371, %v1370
    %v1434 = vpack.c.b16 %v1373, %v1372
    %v1435 = vpack.c.b16 %v1375, %v1374
    %v1436 = vpack.c.b16 %v1377, %v1376
    %v1437 = vpack.c.b16 %v1379, %v1378
    %v1438 = vpack.c.b16 %v1381, %v1380
    %v1439 = vpack.c.b16 %v1383, %v1382
    %v1440 = vpack.c.b16 %v1385, %v1384
    %v1441 = vpack.c.b16 %v1387, %v1386
    %v1442 = vpack.c.b16 %v1389, %v1388
    %v1443 = vpack.c.b16 %v1391, %v1390
    %v1444 = vpack.c.b16 %v1393, %v1392
    %v1445 = vpack.c.b16 %v1395, %v1394
    %v1446 = vpack.c.b16 %v1397, %v1396
    %v1447 = vpack.c.b16 %v1399, %v1398
    %v1448 = vpack.c.b16 %v1401, %v1400
    %v1449 = vpack.c.b16 %v1403, %v1402
    %v1450 = vpack.c.b16 %v1405, %v1404
    %v1451 = vpack.c.b16 %v1407, %v1406
    %v1452 = vpack.c.b16 %v1409, %v1408
    %v1453 = vpack.c.b16 %v1411, %v1410
    %v1454 = vpack.c.b16 %v1413, %v1412
    %v1455 = vpack.c.b16 %v1415, %v1414
    %v1456 = vpack.c.b16 %v1417, %v1416
    %v1457 = vpack.c.b16 %v1419, %v1418
    %v1458 = vpack.c.b16 %v1421, %v1420
    %v1459 = vpack.c.b16 %v1423, %v1422
    %v1460 = vpack.c.b16 %v1425, %v1424
    %v1461 = vpack.c.b16 %v1427, %v1426
    %v1462 = vpack.c.b16 %v1429, %v1428
    %v1463 = vpack.c.b16 %v1431, %v1430
    %1496 = vmatprep.subr.bf16.mxu0 0
    %1497 = vmatpush1.bf16.msra.mxu0 %v1432
    %1498 = vmatprep.subr.bf16.mxu0 0
    %1499 = vmatpush1.bf16.msra.mxu0 %v1433
    %1500 = vmatprep.subr.bf16.mxu0 0
    %1501 = vmatpush1.bf16.msra.mxu0 %v1434
    %1502 = vmatprep.subr.bf16.mxu0 0
    %1503 = vmatpush1.bf16.msra.mxu0 %v1435
    %1504 = vmatprep.subr.bf16.mxu0 0
    %1505 = vmatpush1.bf16.msra.mxu0 %v1436
    %1506 = vmatprep.subr.bf16.mxu0 0
    %1507 = vmatpush1.bf16.msra.mxu0 %v1437
    %1508 = vmatprep.subr.bf16.mxu0 0
    %1509 = vmatpush1.bf16.msra.mxu0 %v1438
    %1510 = vmatprep.subr.bf16.mxu0 0
    %1511 = vmatpush1.bf16.msra.mxu0 %v1439
    %1512 = vmatprep.subr.bf16.mxu0 0
    %1513 = vmatpush1.bf16.msra.mxu0 %v1440
    %1514 = vmatprep.subr.bf16.mxu0 0
    %1515 = vmatpush1.bf16.msra.mxu0 %v1441
    %1516 = vmatprep.subr.bf16.mxu0 0
    %1517 = vmatpush1.bf16.msra.mxu0 %v1442
    %1518 = vmatprep.subr.bf16.mxu0 0
    %1519 = vmatpush1.bf16.msra.mxu0 %v1443
    %1520 = vmatprep.subr.bf16.mxu0 0
    %1521 = vmatpush1.bf16.msra.mxu0 %v1444
    %1522 = vmatprep.subr.bf16.mxu0 0
    %1523 = vmatpush1.bf16.msra.mxu0 %v1445
    %1524 = vmatprep.subr.bf16.mxu0 0
    %1525 = vmatpush1.bf16.msra.mxu0 %v1446
    %1526 = vmatprep.subr.bf16.mxu0 0
    %1527 = vmatpush1.bf16.msra.mxu0 %v1447
    %1528 = vmatprep.mubr.bf16.mxu0 %v1230
    %1529 = vmatmul.mubr.bf16.gmra.mrb[0].mxu0 %v1229
    %v1530 = vpop.f32.mrb[0].mxu0
    %v1531 = vadd.f32 %v1302, %v1530
    %v1532 = vpop.f32.mrb[0].mxu0
    %v1533 = vpop.f32.mrb[0].mxu0
    %v1534 = vpop.f32.mrb[0].mxu0
    %1535 = vdwg.mxu0
    %1536 = vmatprep.subr.bf16.mxu0 0
    %1537 = vmatpush1.bf16.msra.mxu0 %v1448
    %1538 = vmatprep.subr.bf16.mxu0 0
    %1539 = vmatpush1.bf16.msra.mxu0 %v1449
    %1540 = vmatprep.subr.bf16.mxu0 0
    %1541 = vmatpush1.bf16.msra.mxu0 %v1450
    %1542 = vmatprep.subr.bf16.mxu0 0
    %1543 = vmatpush1.bf16.msra.mxu0 %v1451
    %1544 = vmatprep.subr.bf16.mxu0 0
    %1545 = vmatpush1.bf16.msra.mxu0 %v1452
    %1546 = vmatprep.subr.bf16.mxu0 0
    %1547 = vmatpush1.bf16.msra.mxu0 %v1453
    %1548 = vmatprep.subr.bf16.mxu0 0
    %1549 = vmatpush1.bf16.msra.mxu0 %v1454
    %1550 = vmatprep.subr.bf16.mxu0 0
    %1551 = vmatpush1.bf16.msra.mxu0 %v1455
    %1552 = vmatprep.subr.bf16.mxu0 0
    %1553 = vmatpush1.bf16.msra.mxu0 %v1456
    %1554 = vmatprep.subr.bf16.mxu0 0
    %1555 = vmatpush1.bf16.msra.mxu0 %v1457
    %1556 = vmatprep.subr.bf16.mxu0 0
    %1557 = vmatpush1.bf16.msra.mxu0 %v1458
    %1558 = vmatprep.subr.bf16.mxu0 0
    %1559 = vmatpush1.bf16.msra.mxu0 %v1459
    %1560 = vmatprep.subr.bf16.mxu0 0
    %1561 = vmatpush1.bf16.msra.mxu0 %v1460
    %1562 = vmatprep.subr.bf16.mxu0 0
    %1563 = vmatpush1.bf16.msra.mxu0 %v1461
    %1564 = vmatprep.subr.bf16.mxu0 0
    %1565 = vmatpush1.bf16.msra.mxu0 %v1462
    %1566 = vmatprep.subr.bf16.mxu0 0
    %1567 = vmatpush1.bf16.msra.mxu0 %v1463
    %1568 = vmatprep.mubr.bf16.mxu0 %v1232
    %1569 = vmatmul.mubr.bf16.gmra.mrb[0].mxu0 %v1231
    %v1570 = vpop.f32.mrb[0].mxu0
    %v1571 = vadd.f32 %v1531, %v1570
    %v1572 = vpop.f32.mrb[0].mxu0
    %v1573 = vpop.f32.mrb[0].mxu0
    %v1574 = vpop.f32.mrb[0].mxu0
    %1575 = vdwg.mxu0
    %v1576 = vpack.c.bf16 %v1571, %v1571
    %1577 = vst [vmem:[#allocation10] sm:$0xf] %v1576
    // Predicated region
    $region46: #{qnetwork_forward.1} parent=1 // pred_check
      _
    $region47: #{qnetwork_forward.1} parent=1 // pred_check_branch
      %1579 = sbr.rel (0) target = $region49
    $region48: #{qnetwork_forward.1} parent=1 // pred_region
      %s1581 = ssub.s32 64, 64
      %1582 = vsyncadd [#allocation4], %s1581
      %s1584 = sshll.u32 [#allocation10], 4
      %s1585 = int_to_ptr.vmem [resolvable:$true] %s1584
      %1587 = dma.vmem_to_hbm [thread:$0]  %s1585, 64, %s7, [#allocation4]
    $region49: #{qnetwork_forward.1} parent=1 // pred_fallthru
      _
    // Predicated region
    $region50: #{qnetwork_forward.1} parent=1 // pred_check
      _
    $region51: #{qnetwork_forward.1} parent=1 // pred_check_branch
      %1589 = sbr.rel (0) target = $region53
    $region52: #{qnetwork_forward.1} parent=1 // pred_region
      %1590 = dma.done [#allocation4], 64
    $region53: #{qnetwork_forward.1} parent=1 // pred_fallthru
      _
    %1591 = vsyncpa [#allocation3], 1
    %1592 = vsyncpa [#allocation6], 1
    %1593 = vsyncpa [#allocation9], 1
    %1594 = vsyncpa [#allocation4], 1

// kernel: qnetwork_forward.1
$region0: #{qnetwork_forward.1}
  #allocation0 [shape = 'u32[]', space=smem, size = 0x4, offset = 0x4, fixed_abs, tag = 'smem constant byte address 0x4 - core index']
  #allocation1 [shape = 'u32[144,128]{1,0:T(1,128)}', space=vmem, size = 0x12000, scoped, tag = 'internal scratch']
  %s0 = inlined_call_operand.hbm [shape: f32[8,48], index: 0, kind: input, shape index: {}]
  %s1 = inlined_call_operand.hbm [shape: bf16[48,512], index: 1, kind: input, shape index: {}]
  %s2 = inlined_call_operand.vmem [shape: f32[1,512], index: 2, kind: input, shape index: {}]
  %s3 = inlined_call_operand.hbm [shape: bf16[512,512], index: 3, kind: input, shape index: {}]
  %s4 = inlined_call_operand.vmem [shape: f32[1,512], index: 4, kind: input, shape index: {}]
  %s5 = inlined_call_operand.hbm [shape: bf16[512,128], index: 5, kind: input, shape index: {}]
  %s6 = inlined_call_operand.vmem [shape: f32[1,128], index: 6, kind: input, shape index: {}]
  %s7 = inlined_call_operand.hbm [shape: bf16[8,128], index: 7, kind: output, shape index: {}]
  %s8 = sld [smem:[#allocation0]]
  $region54: #{qnetwork_forward.1} parent=0
    _
  %s10 = ssub.s32 1, %s8
  %s11 = scalar_select 0, %s10, %s8
  $region1: #{qnetwork_forward.1} parent=0
    #allocation2 [shape = 'u8[4096]{0}', space=vmem, size = 0x1000, scoped, tag = 'input window, operand 0, single buffered']
    #allocation3 [shape = 's32[1]{0}', space=sflag, size = 0x4, scoped, tag = 'scoped memory for qnetwork_forward.1']
    #allocation4 [shape = 's32[1]{0}', space=sflag, size = 0x4, scoped, tag = 'scoped memory for qnetwork_forward.1']
    #allocation5 [shape = 'u8[49152]{0}', space=vmem, size = 0xc000, scoped, tag = 'input window, operand 1, single buffered']
    #allocation6 [shape = 's32[1]{0}', space=sflag, size = 0x4, scoped, tag = 'scoped memory for qnetwork_forward.1']
    #allocation7 [shape = 'u8[524288]{0}', space=vmem, size = 0x80000, scoped, tag = 'input window, operand 3, single buffered']
    #allocation8 [shape = 'u8[131072]{0}', space=vmem, size = 0x20000, scoped, tag = 'input window, operand 5, single buffered']
    #allocation9 [shape = 's32[1]{0}', space=sflag, size = 0x4, scoped, tag = 'scoped memory for qnetwork_forward.1']
    #allocation10 [shape = 'u8[2048]{0}', space=vmem, size = 0x800, scoped, tag = 'output window, operand 0, single buffered']
    %12 = vsyncpa [#allocation3], 0
    %13 = vsyncpa [#allocation6], 0
    %14 = vsyncpa [#allocation9], 0
    %15 = vsyncpa [#allocation4], 0
    // Predicated region
    $region2: #{qnetwork_forward.1} parent=1 // pred_check
      _
    $region3: #{qnetwork_forward.1} parent=1 // pred_check_branch
      %17 = sbr.rel (0) target = $region5
    $region4: #{qnetwork_forward.1} parent=1 // pred_region
      %s19 = ssub.s32 128, 128
      %20 = vsyncadd [#allocation3], %s19
      %s22 = sshll.u32 [#allocation2], 4
      %s23 = int_to_ptr.vmem [resolvable:$true] %s22
      %25 = dma.hbm_to_vmem [thread:$0]  %s0, 128, %s23, [#allocation3]
    $region5: #{qnetwork_forward.1} parent=1 // pred_fallthru
      _
    // Predicated region
    $region6: #{qnetwork_forward.1} parent=1 // pred_check
      _
    $region7: #{qnetwork_forward.1} parent=1 // pred_check_branch
      %27 = sbr.rel (0) target = $region9
    $region8: #{qnetwork_forward.1} parent=1 // pred_region
      %s29 = ssub.s32 1536, 1536
      %30 = vsyncadd [#allocation6], %s29
      %s31 = sshll.u32 [#allocation5], 4
      %s32 = int_to_ptr.vmem [resolvable:$true] %s31
      %37 = dma.hbm_to_vmem [thread:$0]  %s1, 1536, %s32, [#allocation6], 256, 256, 16
    $region9: #{qnetwork_forward.1} parent=1 // pred_fallthru
      _
    // Predicated region
    $region10: #{qnetwork_forward.1} parent=1 // pred_check
      _
    $region11: #{qnetwork_forward.1} parent=1 // pred_check_branch
      %39 = sbr.rel (0) target = $region13
    $region12: #{qnetwork_forward.1} parent=1 // pred_region
      _
    $region13: #{qnetwork_forward.1} parent=1 // pred_fallthru
      _
    // Predicated region
    $region14: #{qnetwork_forward.1} parent=1 // pred_check
      _
    $region15: #{qnetwork_forward.1} parent=1 // pred_check_branch
      %41 = sbr.rel (0) target = $region17
    $region16: #{qnetwork_forward.1} parent=1 // pred_region
      %s43 = ssub.s32 16384, 16384
      %44 = vsyncadd [#allocation6], %s43
      %s45 = sshll.u32 [#allocation7], 4
      %s46 = int_to_ptr.vmem [resolvable:$true] %s45
      %51 = dma.hbm_to_vmem [thread:$0]  %s3, 16384, %s46, [#allocation6], 256, 256, 16
    $region17: #{qnetwork_forward.1} parent=1 // pred_fallthru
      _
    // Predicated region
    $region18: #{qnetwork_forward.1} parent=1 // pred_check
      _
    $region19: #{qnetwork_forward.1} parent=1 // pred_check_branch
      %53 = sbr.rel (0) target = $region21
    $region20: #{qnetwork_forward.1} parent=1 // pred_region
      _
    $region21: #{qnetwork_forward.1} parent=1 // pred_fallthru
      _
    // Predicated region
    $region22: #{qnetwork_forward.1} parent=1 // pred_check
      _
    $region23: #{qnetwork_forward.1} parent=1 // pred_check_branch
      %55 = sbr.rel (0) target = $region25
    $region24: #{qnetwork_forward.1} parent=1 // pred_region
      %s57 = ssub.s32 4096, 4096
      %58 = vsyncadd [#allocation9], %s57
      %s59 = sshll.u32 [#allocation8], 4
      %s60 = int_to_ptr.vmem [resolvable:$true] %s59
      %65 = dma.hbm_to_vmem [thread:$0]  %s5, 4096, %s60, [#allocation9], 64, 64, 4
    $region25: #{qnetwork_forward.1} parent=1 // pred_fallthru
      _
    // Predicated region
    $region26: #{qnetwork_forward.1} parent=1 // pred_check
      _
    $region27: #{qnetwork_forward.1} parent=1 // pred_check_branch
      %67 = sbr.rel (0) target = $region29
    $region28: #{qnetwork_forward.1} parent=1 // pred_region
      _
    $region29: #{qnetwork_forward.1} parent=1 // pred_fallthru
      _
    // Predicated region
    $region30: #{qnetwork_forward.1} parent=1 // pred_check
      _
    $region31: #{qnetwork_forward.1} parent=1 // pred_check_branch
      %69 = sbr.rel (0) target = $region33
    $region32: #{qnetwork_forward.1} parent=1 // pred_region
      %70 = dma.done [#allocation3], 128
    $region33: #{qnetwork_forward.1} parent=1 // pred_fallthru
      _
    // Predicated region
    $region34: #{qnetwork_forward.1} parent=1 // pred_check
      _
    $region35: #{qnetwork_forward.1} parent=1 // pred_check_branch
      %72 = sbr.rel (0) target = $region37
    $region36: #{qnetwork_forward.1} parent=1 // pred_region
      %73 = dma.done [#allocation6], 1536
    $region37: #{qnetwork_forward.1} parent=1 // pred_fallthru
      _
    // Predicated region
    $region38: #{qnetwork_forward.1} parent=1 // pred_check
      _
    $region39: #{qnetwork_forward.1} parent=1 // pred_check_branch
      %75 = sbr.rel (0) target = $region41
    $region40: #{qnetwork_forward.1} parent=1 // pred_region
      %76 = dma.done [#allocation6], 16384
    $region41: #{qnetwork_forward.1} parent=1 // pred_fallthru
      _
    // Predicated region
    $region42: #{qnetwork_forward.1} parent=1 // pred_check
      _
    $region43: #{qnetwork_forward.1} parent=1 // pred_check_branch
      %78 = sbr.rel (0) target = $region45
    $region44: #{qnetwork_forward.1} parent=1 // pred_region
      %79 = dma.done [#allocation9], 4096
    $region45: #{qnetwork_forward.1} parent=1 // pred_fallthru
      _
    %v81 = vld [vmem:[#allocation2] sm:$0xff]
    %v82 = vpack.c.bf16 %v81, %v81
    %v83 = vld [vmem:[#allocation5] sm:$0xff]
    %v84 = vld [vmem:[#allocation5 + $0x8] sm:$0xff]
    %v85 = vld [vmem:[#allocation5 + $0x10] sm:$0xff]
    %v86 = vld [vmem:[#allocation5 + $0x18] sm:$0xff]
    %v87 = vld [vmem:[#allocation5 + $0x20] sm:$0xff]
    %v88 = vld [vmem:[#allocation5 + $0x28] sm:$0xff]
    %v89 = vld [vmem:[#allocation5 + $0x30] sm:$0xff]
    %v90 = vld [vmem:[#allocation5 + $0x38] sm:$0xff]
    %v91 = vld [vmem:[#allocation5 + $0x40] sm:$0xff]
    %v92 = vld [vmem:[#allocation5 + $0x48] sm:$0xff]
    %v93 = vld [vmem:[#allocation5 + $0x50] sm:$0xff]
    %v94 = vld [vmem:[#allocation5 + $0x58] sm:$0xff]
    %v95 = vld [vmem:[%s2] sm:$0xf]
    %v97 = vlaneseq
    %v98 = vshrl.u32 %v97, 7
    %v99 = vsub.s32 0, %v98
    %v100 = vrot.slane %v95, %v99
    %v101 = vlaneseq
    %v102 = vshrl.u32 %v101, 7
    %v103 = vsub.s32 1, %v102
    %v104 = vrot.slane %v95, %v103
    %v105 = vlaneseq
    %v106 = vshrl.u32 %v105, 7
    %v107 = vsub.s32 2, %v106
    %v108 = vrot.slane %v95, %v107
    %v109 = vlaneseq
    %v110 = vshrl.u32 %v109, 7
    %v111 = vsub.s32 3, %v110
    %v112 = vrot.slane %v95, %v111
    %v129 = vunpack.c.l.b16 %v83
    %v130 = vunpack.c.h.b16 %v83
    %v131 = vunpack.c.l.b16 %v84
    %v132 = vunpack.c.h.b16 %v84
    %v133 = vunpack.c.l.b16 %v85
    %v134 = vunpack.c.h.b16 %v85
    %v135 = vunpack.c.l.b16 %v86
    %v136 = vunpack.c.h.b16 %v86
    %v137 = vunpack.c.l.b16 %v87
    %v138 = vunpack.c.h.b16 %v87
    %v139 = vunpack.c.l.b16 %v88
    %v140 = vunpack.c.h.b16 %v88
    %v141 = vunpack.c.l.b16 %v89
    %v142 = vunpack.c.h.b16 %v89
    %v143 = vunpack.c.l.b16 %v90
    %v144 = vunpack.c.h.b16 %v90
    %v145 = vunpack.c.l.b16 %v91
    %v146 = vunpack.c.h.b16 %v91
    %v147 = vunpack.c.l.b16 %v92
    %v148 = vunpack.c.h.b16 %v92
    %v149 = vunpack.c.l.b16 %v93
    %v150 = vunpack.c.h.b16 %v93
    %v151 = vunpack.c.l.b16 %v94
    %v152 = vunpack.c.h.b16 %v94
    %v153 = vpack.c.b16 %v133, %v129
    %v154 = vpack.c.b16 %v134, %v130
    %v155 = vpack.c.b16 %v135, %v131
    %v156 = vpack.c.b16 %v136, %v132
    %v157 = vpack.c.b16 %v141, %v137
    %v158 = vpack.c.b16 %v142, %v138
    %v159 = vpack.c.b16 %v143, %v139
    %v160 = vpack.c.b16 %v144, %v140
    %v161 = vpack.c.b16 %v149, %v145
    %v162 = vpack.c.b16 %v150, %v146
    %v163 = vpack.c.b16 %v151, %v147
    %v164 = vpack.c.b16 %v152, %v148
    %vm177 = vcmask 392192
    %v179 = vsel %vm177, %v82, 0
    %181 = vmatprep.subr.bf16.mxu0 %v154
    %182 = vmatpush1.bf16.msra.mxu0 %v153
    %183 = vmatprep.subr.bf16.mxu0 %v158
    %184 = vmatpush1.bf16.msra.mxu0 %v157
    %185 = vmatprep.subr.bf16.mxu0 %v162
    %186 = vmatpush1.bf16.msra.mxu0 %v161
    %187 = vmatprep.subr.bf16.mxu0 0
    %188 = vmatpush1.bf16.msra.mxu0 0
    %189 = vmatprep.subr.bf16.mxu0 0
    %190 = vmatpush1.bf16.msra.mxu0 0
    %191 = vmatprep.subr.bf16.mxu0 0
    %192 = vmatpush1.bf16.msra.mxu0 0
    %193 = vmatprep.subr.bf16.mxu0 0
    %194 = vmatpush1.bf16.msra.mxu0 0
    %195 = vmatprep.subr.bf16.mxu0 0
    %196 = vmatpush1.bf16.msra.mxu0 0
    %197 = vmatprep.subr.bf16.mxu0 0
    %198 = vmatpush1.bf16.msra.mxu0 0
    %199 = vmatprep.subr.bf16.mxu0 0
    %200 = vmatpush1.bf16.msra.mxu0 0
    %201 = vmatprep.subr.bf16.mxu0 0
    %202 = vmatpush1.bf16.msra.mxu0 0
    %203 = vmatprep.subr.bf16.mxu0 0
    %204 = vmatpush1.bf16.msra.mxu0 0
    %205 = vmatprep.subr.bf16.mxu0 0
    %206 = vmatpush1.bf16.msra.mxu0 0
    %207 = vmatprep.subr.bf16.mxu0 0
    %208 = vmatpush1.bf16.msra.mxu0 0
    %209 = vmatprep.subr.bf16.mxu0 0
    %210 = vmatpush1.bf16.msra.mxu0 0
    %211 = vmatprep.subr.bf16.mxu0 0
    %212 = vmatpush1.bf16.msra.mxu0 0
    %213 = vmatprep.mubr.bf16.mxu0 0
    %214 = vmatmul.mubr.bf16.gmra.mrb[0].mxu0 %v179
    %v215 = vpop.f32.mrb[0].mxu0
    %v216 = vadd.f32 %v100, %v215
    %v217 = vpop.f32.mrb[0].mxu0
    %v218 = vadd.f32 %v104, %v217
    %v219 = vpop.f32.mrb[0].mxu0
    %v220 = vpop.f32.mrb[0].mxu0
    %221 = vdwg.mxu0
    %222 = vmatprep.subr.bf16.mxu0 %v156
    %223 = vmatpush1.bf16.msra.mxu0 %v155
    %224 = vmatprep.subr.bf16.mxu0 %v160
    %225 = vmatpush1.bf16.msra.mxu0 %v159
    %226 = vmatprep.subr.bf16.mxu0 %v164
    %227 = vmatpush1.bf16.msra.mxu0 %v163
    %228 = vmatprep.subr.bf16.mxu0 0
    %229 = vmatpush1.bf16.msra.mxu0 0
    %230 = vmatprep.subr.bf16.mxu0 0
    %231 = vmatpush1.bf16.msra.mxu0 0
    %232 = vmatprep.subr.bf16.mxu0 0
    %233 = vmatpush1.bf16.msra.mxu0 0
    %234 = vmatprep.subr.bf16.mxu0 0
    %235 = vmatpush1.bf16.msra.mxu0 0
    %236 = vmatprep.subr.bf16.mxu0 0
    %237 = vmatpush1.bf16.msra.mxu0 0
    %238 = vmatprep.subr.bf16.mxu0 0
    %239 = vmatpush1.bf16.msra.mxu0 0
    %240 = vmatprep.subr.bf16.mxu0 0
    %241 = vmatpush1.bf16.msra.mxu0 0
    %242 = vmatprep.subr.bf16.mxu0 0
    %243 = vmatpush1.bf16.msra.mxu0 0
    %244 = vmatprep.subr.bf16.mxu0 0
    %245 = vmatpush1.bf16.msra.mxu0 0
    %246 = vmatprep.subr.bf16.mxu0 0
    %247 = vmatpush1.bf16.msra.mxu0 0
    %248 = vmatprep.subr.bf16.mxu0 0
    %249 = vmatpush1.bf16.msra.mxu0 0
    %250 = vmatprep.subr.bf16.mxu0 0
    %251 = vmatpush1.bf16.msra.mxu0 0
    %252 = vmatprep.subr.bf16.mxu0 0
    %253 = vmatpush1.bf16.msra.mxu0 0
    %254 = vmatprep.mubr.bf16.mxu0 0
    %255 = vmatmul.mubr.bf16.gmra.mrb[0].mxu0 %v179
    %v256 = vpop.f32.mrb[0].mxu0
    %v257 = vadd.f32 %v108, %v256
    %v258 = vpop.f32.mrb[0].mxu0
    %v259 = vadd.f32 %v112, %v258
    %v260 = vpop.f32.mrb[0].mxu0
    %v261 = vpop.f32.mrb[0].mxu0
    %262 = vdwg.mxu0
    %v263 = vmax.f32 %v216, 0.0
    %v264 = vmax.f32 %v218, 0.0
    %v265 = vmax.f32 %v257, 0.0
    %v266 = vmax.f32 %v259, 0.0
    %v267 = vpack.c.bf16 %v263, %v263
    %v268 = vpack.c.bf16 %v264, %v264
    %v269 = vpack.c.bf16 %v265, %v265
    %v270 = vpack.c.bf16 %v266, %v266
    %v271 = vld [vmem:[#allocation7] sm:$0xff]
    %v272 = vld [vmem:[#allocation7 + $0x8] sm:$0xff]
    %v273 = vld [vmem:[#allocation7 + $0x10] sm:$0xff]
    %v274 = vld [vmem:[#allocation7 + $0x18] sm:$0xff]
    %v275 = vld [vmem:[#allocation7 + $0x20] sm:$0xff]
    %v276 = vld [vmem:[#allocation7 + $0x28] sm:$0xff]
    %v277 = vld [vmem:[#allocation7 + $0x30] sm:$0xff]
    %v278 = vld [vmem:[#allocation7 + $0x38] sm:$0xff]
    %v279 = vld [vmem:[#allocation7 + $0x40] sm:$0xff]
    %v280 = vld [vmem:[#allocation7 + $0x48] sm:$0xff]
    %v281 = vld [vmem:[#allocation7 + $0x50] sm:$0xff]
    %v282 = vld [vmem:[#allocation7 + $0x58] sm:$0xff]
    %v283 = vld [vmem:[#allocation7 + $0x60] sm:$0xff]
    %v284 = vld [vmem:[#allocation7 + $0x68] sm:$0xff]
    %v285 = vld [vmem:[#allocation7 + $0x70] sm:$0xff]
    %v286 = vld [vmem:[#allocation7 + $0x78] sm:$0xff]
    %v287 = vld [vmem:[#allocation7 + $0x80] sm:$0xff]
    %v288 = vld [vmem:[#allocation7 + $0x88] sm:$0xff]
    %v289 = vld [vmem:[#allocation7 + $0x90] sm:$0xff]
    %v290 = vld [vmem:[#allocation7 + $0x98] sm:$0xff]
    %v291 = vld [vmem:[#allocation7 + $0xa0] sm:$0xff]
    %v292 = vld [vmem:[#allocation7 + $0xa8] sm:$0xff]
    %v293 = vld [vmem:[#allocation7 + $0xb0] sm:$0xff]
    %v294 = vld [vmem:[#allocation7 + $0xb8] sm:$0xff]
    %v295 = vld [vmem:[#allocation7 + $0xc0] sm:$0xff]
    %v296 = vld [vmem:[#allocation7 + $0xc8] sm:$0xff]
    %v297 = vld [vmem:[#allocation7 + $0xd0] sm:$0xff]
    %v298 = vld [vmem:[#allocation7 + $0xd8] sm:$0xff]
    %v299 = vld [vmem:[#allocation7 + $0xe0] sm:$0xff]
    %v300 = vld [vmem:[#allocation7 + $0xe8] sm:$0xff]
    %v301 = vld [vmem:[#allocation7 + $0xf0] sm:$0xff]
    %v302 = vld [vmem:[#allocation7 + $0xf8] sm:$0xff]
    %v303 = vld [vmem:[#allocation7 + $0x100] sm:$0xff]
    %v304 = vld [vmem:[#allocation7 + $0x108] sm:$0xff]
    %v305 = vld [vmem:[#allocation7 + $0x110] sm:$0xff]
    %v306 = vld [vmem:[#allocation7 + $0x118] sm:$0xff]
    %v307 = vld [vmem:[#allocation7 + $0x120] sm:$0xff]
    %v308 = vld [vmem:[#allocation7 + $0x128] sm:$0xff]
    %v309 = vld [vmem:[#allocation7 + $0x130] sm:$0xff]
    %v310 = vld [vmem:[#allocation7 + $0x138] sm:$0xff]
    %v311 = vld [vmem:[#allocation7 + $0x140] sm:$0xff]
    %v312 = vld [vmem:[#allocation7 + $0x148] sm:$0xff]
    %v313 = vld [vmem:[#allocation7 + $0x150] sm:$0xff]
    %v314 = vld [vmem:[#allocation7 + $0x158] sm:$0xff]
    %v315 = vld [vmem:[#allocation7 + $0x160] sm:$0xff]
    %v316 = vld [vmem:[#allocation7 + $0x168] sm:$0xff]
    %v317 = vld [vmem:[#allocation7 + $0x170] sm:$0xff]
    %v318 = vld [vmem:[#allocation7 + $0x178] sm:$0xff]
    %v319 = vld [vmem:[#allocation7 + $0x180] sm:$0xff]
    %v320 = vld [vmem:[#allocation7 + $0x188] sm:$0xff]
    %v321 = vld [vmem:[#allocation7 + $0x190] sm:$0xff]
    %v322 = vld [vmem:[#allocation7 + $0x198] sm:$0xff]
    %v323 = vld [vmem:[#allocation7 + $0x1a0] sm:$0xff]
    %v324 = vld [vmem:[#allocation7 + $0x1a8] sm:$0xff]
    %v325 = vld [vmem:[#allocation7 + $0x1b0] sm:$0xff]
    %v326 = vld [vmem:[#allocation7 + $0x1b8] sm:$0xff]
    %v327 = vld [vmem:[#allocation7 + $0x1c0] sm:$0xff]
    %v328 = vld [vmem:[#allocation7 + $0x1c8] sm:$0xff]
    %v329 = vld [vmem:[#allocation7 + $0x1d0] sm:$0xff]
    %v330 = vld [vmem:[#allocation7 + $0x1d8] sm:$0xff]
    %v331 = vld [vmem:[#allocation7 + $0x1e0] sm:$0xff]
    %v332 = vld [vmem:[#allocation7 + $0x1e8] sm:$0xff]
    %v333 = vld [vmem:[#allocation7 + $0x1f0] sm:$0xff]
    %v334 = vld [vmem:[#allocation7 + $0x1f8] sm:$0xff]
    %v335 = vld [vmem:[#allocation7 + $0x200] sm:$0xff]
    %v336 = vld [vmem:[#allocation7 + $0x208] sm:$0xff]
    %v337 = vld [vmem:[#allocation7 + $0x210] sm:$0xff]
    %v338 = vld [vmem:[#allocation7 + $0x218] sm:$0xff]
    %v339 = vld [vmem:[#allocation7 + $0x220] sm:$0xff]
    %v340 = vld [vmem:[#allocation7 + $0x228] sm:$0xff]
    %v341 = vld [vmem:[#allocation7 + $0x230] sm:$0xff]
    %v342 = vld [vmem:[#allocation7 + $0x238] sm:$0xff]
    %v343 = vld [vmem:[#allocation7 + $0x240] sm:$0xff]
    %v344 = vld [vmem:[#allocation7 + $0x248] sm:$0xff]
    %v345 = vld [vmem:[#allocation7 + $0x250] sm:$0xff]
    %v346 = vld [vmem:[#allocation7 + $0x258] sm:$0xff]
    %v347 = vld [vmem:[#allocation7 + $0x260] sm:$0xff]
    %v348 = vld [vmem:[#allocation7 + $0x268] sm:$0xff]
    %v349 = vld [vmem:[#allocation7 + $0x270] sm:$0xff]
    %v350 = vld [vmem:[#allocation7 + $0x278] sm:$0xff]
    %v351 = vld [vmem:[#allocation7 + $0x280] sm:$0xff]
    %v352 = vld [vmem:[#allocation7 + $0x288] sm:$0xff]
    %v353 = vld [vmem:[#allocation7 + $0x290] sm:$0xff]
    %v354 = vld [vmem:[#allocation7 + $0x298] sm:$0xff]
    %v355 = vld [vmem:[#allocation7 + $0x2a0] sm:$0xff]
    %v356 = vld [vmem:[#allocation7 + $0x2a8] sm:$0xff]
    %v357 = vld [vmem:[#allocation7 + $0x2b0] sm:$0xff]
    %v358 = vld [vmem:[#allocation7 + $0x2b8] sm:$0xff]
    %v359 = vld [vmem:[#allocation7 + $0x2c0] sm:$0xff]
    %v360 = vld [vmem:[#allocation7 + $0x2c8] sm:$0xff]
    %v361 = vld [vmem:[#allocation7 + $0x2d0] sm:$0xff]
    %v362 = vld [vmem:[#allocation7 + $0x2d8] sm:$0xff]
    %v363 = vld [vmem:[#allocation7 + $0x2e0] sm:$0xff]
    %v364 = vld [vmem:[#allocation7 + $0x2e8] sm:$0xff]
    %v365 = vld [vmem:[#allocation7 + $0x2f0] sm:$0xff]
    %v366 = vld [vmem:[#allocation7 + $0x2f8] sm:$0xff]
    %v367 = vld [vmem:[#allocation7 + $0x300] sm:$0xff]
    %v368 = vld [vmem:[#allocation7 + $0x308] sm:$0xff]
    %v369 = vld [vmem:[#allocation7 + $0x310] sm:$0xff]
    %v370 = vld [vmem:[#allocation7 + $0x318] sm:$0xff]
    %v371 = vld [vmem:[#allocation7 + $0x320] sm:$0xff]
    %v372 = vld [vmem:[#allocation7 + $0x328] sm:$0xff]
    %v373 = vld [vmem:[#allocation7 + $0x330] sm:$0xff]
    %v374 = vld [vmem:[#allocation7 + $0x338] sm:$0xff]
    %v375 = vld [vmem:[#allocation7 + $0x340] sm:$0xff]
    %v376 = vld [vmem:[#allocation7 + $0x348] sm:$0xff]
    %v377 = vld [vmem:[#allocation7 + $0x350] sm:$0xff]
    %v378 = vld [vmem:[#allocation7 + $0x358] sm:$0xff]
    %v379 = vld [vmem:[#allocation7 + $0x360] sm:$0xff]
    %v380 = vld [vmem:[#allocation7 + $0x368] sm:$0xff]
    %v381 = vld [vmem:[#allocation7 + $0x370] sm:$0xff]
    %v382 = vld [vmem:[#allocation7 + $0x378] sm:$0xff]
    %v383 = vld [vmem:[#allocation7 + $0x380] sm:$0xff]
    %v384 = vld [vmem:[#allocation7 + $0x388] sm:$0xff]
    %v385 = vld [vmem:[#allocation7 + $0x390] sm:$0xff]
    %v386 = vld [vmem:[#allocation7 + $0x398] sm:$0xff]
    %v387 = vld [vmem:[#allocation7 + $0x3a0] sm:$0xff]
    %v388 = vld [vmem:[#allocation7 + $0x3a8] sm:$0xff]
    %v389 = vld [vmem:[#allocation7 + $0x3b0] sm:$0xff]
    %v390 = vld [vmem:[#allocation7 + $0x3b8] sm:$0xff]
    %v391 = vld [vmem:[#allocation7 + $0x3c0] sm:$0xff]
    %v392 = vld [vmem:[#allocation7 + $0x3c8] sm:$0xff]
    %v393 = vld [vmem:[#allocation7 + $0x3d0] sm:$0xff]
    %v394 = vld [vmem:[#allocation7 + $0x3d8] sm:$0xff]
    %v395 = vld [vmem:[#allocation7 + $0x3e0] sm:$0xff]
    %v396 = vld [vmem:[#allocation7 + $0x3e8] sm:$0xff]
    %v397 = vld [vmem:[#allocation7 + $0x3f0] sm:$0xff]
    %v398 = vld [vmem:[#allocation7 + $0x3f8] sm:$0xff]
    %v399 = vld [vmem:[%s4] sm:$0xf]
    %v401 = vlaneseq
    %v402 = vshrl.u32 %v401, 7
    %v403 = vsub.s32 0, %v402
    %v404 = vrot.slane %v399, %v403
    %v405 = vlaneseq
    %v406 = vshrl.u32 %v405, 7
    %v407 = vsub.s32 1, %v406
    %v408 = vrot.slane %v399, %v407
    %v409 = vlaneseq
    %v410 = vshrl.u32 %v409, 7
    %v411 = vsub.s32 2, %v410
    %v412 = vrot.slane %v399, %v411
    %v413 = vlaneseq
    %v414 = vshrl.u32 %v413, 7
    %v415 = vsub.s32 3, %v414
    %v416 = vrot.slane %v399, %v415
    %v549 = vunpack.c.l.b16 %v271
    %v550 = vunpack.c.h.b16 %v271
    %v551 = vunpack.c.l.b16 %v272
    %v552 = vunpack.c.h.b16 %v272
    %v553 = vunpack.c.l.b16 %v273
    %v554 = vunpack.c.h.b16 %v273
    %v555 = vunpack.c.l.b16 %v274
    %v556 = vunpack.c.h.b16 %v274
    %v557 = vunpack.c.l.b16 %v275
    %v558 = vunpack.c.h.b16 %v275
    %v559 = vunpack.c.l.b16 %v276
    %v560 = vunpack.c.h.b16 %v276
    %v561 = vunpack.c.l.b16 %v277
    %v562 = vunpack.c.h.b16 %v277
    %v563 = vunpack.c.l.b16 %v278
    %v564 = vunpack.c.h.b16 %v278
    %v565 = vunpack.c.l.b16 %v279
    %v566 = vunpack.c.h.b16 %v279
    %v567 = vunpack.c.l.b16 %v280
    %v568 = vunpack.c.h.b16 %v280
    %v569 = vunpack.c.l.b16 %v281
    %v570 = vunpack.c.h.b16 %v281
    %v571 = vunpack.c.l.b16 %v282
    %v572 = vunpack.c.h.b16 %v282
    %v573 = vunpack.c.l.b16 %v283
    %v574 = vunpack.c.h.b16 %v283
    %v575 = vunpack.c.l.b16 %v284
    %v576 = vunpack.c.h.b16 %v284
    %v577 = vunpack.c.l.b16 %v285
    %v578 = vunpack.c.h.b16 %v285
    %v579 = vunpack.c.l.b16 %v286
    %v580 = vunpack.c.h.b16 %v286
    %v581 = vunpack.c.l.b16 %v287
    %v582 = vunpack.c.h.b16 %v287
    %v583 = vunpack.c.l.b16 %v288
    %v584 = vunpack.c.h.b16 %v288
    %v585 = vunpack.c.l.b16 %v289
    %v586 = vunpack.c.h.b16 %v289
    %v587 = vunpack.c.l.b16 %v290
    %v588 = vunpack.c.h.b16 %v290
    %v589 = vunpack.c.l.b16 %v291
    %v590 = vunpack.c.h.b16 %v291
    %v591 = vunpack.c.l.b16 %v292
    %v592 = vunpack.c.h.b16 %v292
    %v593 = vunpack.c.l.b16 %v293
    %v594 = vunpack.c.h.b16 %v293
    %v595 = vunpack.c.l.b16 %v294
    %v596 = vunpack.c.h.b16 %v294
    %v597 = vunpack.c.l.b16 %v295
    %v598 = vunpack.c.h.b16 %v295
    %v599 = vunpack.c.l.b16 %v296
    %v600 = vunpack.c.h.b16 %v296
    %v601 = vunpack.c.l.b16 %v297
    %v602 = vunpack.c.h.b16 %v297
    %v603 = vunpack.c.l.b16 %v298
    %v604 = vunpack.c.h.b16 %v298
    %v605 = vunpack.c.l.b16 %v299
    %v606 = vunpack.c.h.b16 %v299
    %v607 = vunpack.c.l.b16 %v300
    %v608 = vunpack.c.h.b16 %v300
    %v609 = vunpack.c.l.b16 %v301
    %v610 = vunpack.c.h.b16 %v301
    %v611 = vunpack.c.l.b16 %v302
    %v612 = vunpack.c.h.b16 %v302
    %v613 = vunpack.c.l.b16 %v303
    %v614 = vunpack.c.h.b16 %v303
    %v615 = vunpack.c.l.b16 %v304
    %v616 = vunpack.c.h.b16 %v304
    %v617 = vunpack.c.l.b16 %v305
    %v618 = vunpack.c.h.b16 %v305
    %v619 = vunpack.c.l.b16 %v306
    %v620 = vunpack.c.h.b16 %v306
    %v621 = vunpack.c.l.b16 %v307
    %v622 = vunpack.c.h.b16 %v307
    %v623 = vunpack.c.l.b16 %v308
    %v624 = vunpack.c.h.b16 %v308
    %v625 = vunpack.c.l.b16 %v309
    %v626 = vunpack.c.h.b16 %v309
    %v627 = vunpack.c.l.b16 %v310
    %v628 = vunpack.c.h.b16 %v310
    %v629 = vunpack.c.l.b16 %v311
    %v630 = vunpack.c.h.b16 %v311
    %v631 = vunpack.c.l.b16 %v312
    %v632 = vunpack.c.h.b16 %v312
    %v633 = vunpack.c.l.b16 %v313
    %v634 = vunpack.c.h.b16 %v313
    %v635 = vunpack.c.l.b16 %v314
    %v636 = vunpack.c.h.b16 %v314
    %v637 = vunpack.c.l.b16 %v315
    %v638 = vunpack.c.h.b16 %v315
    %v639 = vunpack.c.l.b16 %v316
    %v640 = vunpack.c.h.b16 %v316
    %v641 = vunpack.c.l.b16 %v317
    %v642 = vunpack.c.h.b16 %v317
    %v643 = vunpack.c.l.b16 %v318
    %v644 = vunpack.c.h.b16 %v318
    %v645 = vunpack.c.l.b16 %v319
    %v646 = vunpack.c.h.b16 %v319
    %v647 = vunpack.c.l.b16 %v320
    %v648 = vunpack.c.h.b16 %v320
    %v649 = vunpack.c.l.b16 %v321
    %v650 = vunpack.c.h.b16 %v321
    %v651 = vunpack.c.l.b16 %v322
    %v652 = vunpack.c.h.b16 %v322
    %v653 = vunpack.c.l.b16 %v323
    %v654 = vunpack.c.h.b16 %v323
    %v655 = vunpack.c.l.b16 %v324
    %v656 = vunpack.c.h.b16 %v324
    %v657 = vunpack.c.l.b16 %v325
    %v658 = vunpack.c.h.b16 %v325
    %v659 = vunpack.c.l.b16 %v326
    %v660 = vunpack.c.h.b16 %v326
    %v661 = vunpack.c.l.b16 %v327
    %v662 = vunpack.c.h.b16 %v327
    %v663 = vunpack.c.l.b16 %v328
    %v664 = vunpack.c.h.b16 %v328
    %v665 = vunpack.c.l.b16 %v329
    %v666 = vunpack.c.h.b16 %v329
    %v667 = vunpack.c.l.b16 %v330
    %v668 = vunpack.c.h.b16 %v330
    %v669 = vunpack.c.l.b16 %v331
    %v670 = vunpack.c.h.b16 %v331
    %v671 = vunpack.c.l.b16 %v332
    %v672 = vunpack.c.h.b16 %v332
    %v673 = vunpack.c.l.b16 %v333
    %v674 = vunpack.c.h.b16 %v333
    %v675 = vunpack.c.l.b16 %v334
    %v676 = vunpack.c.h.b16 %v334
    %v677 = vunpack.c.l.b16 %v335
    %v678 = vunpack.c.h.b16 %v335
    %v679 = vunpack.c.l.b16 %v336
    %v680 = vunpack.c.h.b16 %v336
    %v681 = vunpack.c.l.b16 %v337
    %v682 = vunpack.c.h.b16 %v337
    %v683 = vunpack.c.l.b16 %v338
    %v684 = vunpack.c.h.b16 %v338
    %v685 = vunpack.c.l.b16 %v339
    %v686 = vunpack.c.h.b16 %v339
    %v687 = vunpack.c.l.b16 %v340
    %v688 = vunpack.c.h.b16 %v340
    %v689 = vunpack.c.l.b16 %v341
    %v690 = vunpack.c.h.b16 %v341
    %v691 = vunpack.c.l.b16 %v342
    %v692 = vunpack.c.h.b16 %v342
    %v693 = vunpack.c.l.b16 %v343
    %v694 = vunpack.c.h.b16 %v343
    %v695 = vunpack.c.l.b16 %v344
    %v696 = vunpack.c.h.b16 %v344
    %v697 = vunpack.c.l.b16 %v345
    %v698 = vunpack.c.h.b16 %v345
    %v699 = vunpack.c.l.b16 %v346
    %v700 = vunpack.c.h.b16 %v346
    %v701 = vunpack.c.l.b16 %v347
    %v702 = vunpack.c.h.b16 %v347
    %v703 = vunpack.c.l.b16 %v348
    %v704 = vunpack.c.h.b16 %v348
    %v705 = vunpack.c.l.b16 %v349
    %v706 = vunpack.c.h.b16 %v349
    %v707 = vunpack.c.l.b16 %v350
    %v708 = vunpack.c.h.b16 %v350
    %v709 = vunpack.c.l.b16 %v351
    %v710 = vunpack.c.h.b16 %v351
    %v711 = vunpack.c.l.b16 %v352
    %v712 = vunpack.c.h.b16 %v352
    %v713 = vunpack.c.l.b16 %v353
    %v714 = vunpack.c.h.b16 %v353
    %v715 = vunpack.c.l.b16 %v354
    %v716 = vunpack.c.h.b16 %v354
    %v717 = vunpack.c.l.b16 %v355
    %v718 = vunpack.c.h.b16 %v355
    %v719 = vunpack.c.l.b16 %v356
    %v720 = vunpack.c.h.b16 %v356
    %v721 = vunpack.c.l.b16 %v357
    %v722 = vunpack.c.h.b16 %v357
    %v723 = vunpack.c.l.b16 %v358
    %v724 = vunpack.c.h.b16 %v358
    %v725 = vunpack.c.l.b16 %v359
    %v726 = vunpack.c.h.b16 %v359
    %v727 = vunpack.c.l.b16 %v360
    %v728 = vunpack.c.h.b16 %v360
    %v729 = vunpack.c.l.b16 %v361
    %v730 = vunpack.c.h.b16 %v361
    %v731 = vunpack.c.l.b16 %v362
    %v732 = vunpack.c.h.b16 %v362
    %v733 = vunpack.c.l.b16 %v363
    %v734 = vunpack.c.h.b16 %v363
    %v735 = vunpack.c.l.b16 %v364
    %v736 = vunpack.c.h.b16 %v364
    %v737 = vunpack.c.l.b16 %v365
    %v738 = vunpack.c.h.b16 %v365
    %v739 = vunpack.c.l.b16 %v366
    %v740 = vunpack.c.h.b16 %v366
    %v741 = vunpack.c.l.b16 %v367
    %v742 = vunpack.c.h.b16 %v367
    %v743 = vunpack.c.l.b16 %v368
    %v744 = vunpack.c.h.b16 %v368
    %v745 = vunpack.c.l.b16 %v369
    %v746 = vunpack.c.h.b16 %v369
    %v747 = vunpack.c.l.b16 %v370
    %v748 = vunpack.c.h.b16 %v370
    %v749 = vunpack.c.l.b16 %v371
    %v750 = vunpack.c.h.b16 %v371
    %v751 = vunpack.c.l.b16 %v372
    %v752 = vunpack.c.h.b16 %v372
    %v753 = vunpack.c.l.b16 %v373
    %v754 = vunpack.c.h.b16 %v373
    %v755 = vunpack.c.l.b16 %v374
    %v756 = vunpack.c.h.b16 %v374
    %v757 = vunpack.c.l.b16 %v375
    %v758 = vunpack.c.h.b16 %v375
    %v759 = vunpack.c.l.b16 %v376
    %v760 = vunpack.c.h.b16 %v376
    %v761 = vunpack.c.l.b16 %v377
    %v762 = vunpack.c.h.b16 %v377
    %v763 = vunpack.c.l.b16 %v378
    %v764 = vunpack.c.h.b16 %v378
    %v765 = vunpack.c.l.b16 %v379
    %v766 = vunpack.c.h.b16 %v379
    %v767 = vunpack.c.l.b16 %v380
    %v768 = vunpack.c.h.b16 %v380
    %v769 = vunpack.c.l.b16 %v381
    %v770 = vunpack.c.h.b16 %v381
    %v771 = vunpack.c.l.b16 %v382
    %v772 = vunpack.c.h.b16 %v382
    %v773 = vunpack.c.l.b16 %v383
    %v774 = vunpack.c.h.b16 %v383
    %v775 = vunpack.c.l.b16 %v384
    %v776 = vunpack.c.h.b16 %v384
    %v777 = vunpack.c.l.b16 %v385
    %v778 = vunpack.c.h.b16 %v385
    %v779 = vunpack.c.l.b16 %v386
    %v780 = vunpack.c.h.b16 %v386
    %v781 = vunpack.c.l.b16 %v387
    %v782 = vunpack.c.h.b16 %v387
    %v783 = vunpack.c.l.b16 %v388
    %v784 = vunpack.c.h.b16 %v388
    %v785 = vunpack.c.l.b16 %v389
    %v786 = vunpack.c.h.b16 %v389
    %v787 = vunpack.c.l.b16 %v390
    %v788 = vunpack.c.h.b16 %v390
    %v789 = vunpack.c.l.b16 %v391
    %v790 = vunpack.c.h.b16 %v391
    %v791 = vunpack.c.l.b16 %v392
    %v792 = vunpack.c.h.b16 %v392
    %v793 = vunpack.c.l.b16 %v393
    %v794 = vunpack.c.h.b16 %v393
    %v795 = vunpack.c.l.b16 %v394
    %v796 = vunpack.c.h.b16 %v394
    %v797 = vunpack.c.l.b16 %v395
    %v798 = vunpack.c.h.b16 %v395
    %v799 = vunpack.c.l.b16 %v396
    %v800 = vunpack.c.h.b16 %v396
    %v801 = vunpack.c.l.b16 %v397
    %v802 = vunpack.c.h.b16 %v397
    %v803 = vunpack.c.l.b16 %v398
    %v804 = vunpack.c.h.b16 %v398
    %v805 = vpack.c.b16 %v553, %v549
    %v806 = vpack.c.b16 %v554, %v550
    %v807 = vpack.c.b16 %v555, %v551
    %v808 = vpack.c.b16 %v556, %v552
    %v809 = vpack.c.b16 %v561, %v557
    %v810 = vpack.c.b16 %v562, %v558
    %v811 = vpack.c.b16 %v563, %v559
    %v812 = vpack.c.b16 %v564, %v560
    %v813 = vpack.c.b16 %v569, %v565
    %v814 = vpack.c.b16 %v570, %v566
    %v815 = vpack.c.b16 %v571, %v567
    %v816 = vpack.c.b16 %v572, %v568
    %v817 = vpack.c.b16 %v577, %v573
    %v818 = vpack.c.b16 %v578, %v574
    %v819 = vpack.c.b16 %v579, %v575
    %v820 = vpack.c.b16 %v580, %v576
    %v821 = vpack.c.b16 %v585, %v581
    %v822 = vpack.c.b16 %v586, %v582
    %v823 = vpack.c.b16 %v587, %v583
    %v824 = vpack.c.b16 %v588, %v584
    %v825 = vpack.c.b16 %v593, %v589
    %v826 = vpack.c.b16 %v594, %v590
    %v827 = vpack.c.b16 %v595, %v591
    %v828 = vpack.c.b16 %v596, %v592
    %v829 = vpack.c.b16 %v601, %v597
    %v830 = vpack.c.b16 %v602, %v598
    %v831 = vpack.c.b16 %v603, %v599
    %v832 = vpack.c.b16 %v604, %v600
    %v833 = vpack.c.b16 %v609, %v605
    %v834 = vpack.c.b16 %v610, %v606
    %v835 = vpack.c.b16 %v611, %v607
    %v836 = vpack.c.b16 %v612, %v608
    %v837 = vpack.c.b16 %v617, %v613
    %v838 = vpack.c.b16 %v618, %v614
    %v839 = vpack.c.b16 %v619, %v615
    %v840 = vpack.c.b16 %v620, %v616
    %v841 = vpack.c.b16 %v625, %v621
    %v842 = vpack.c.b16 %v626, %v622
    %v843 = vpack.c.b16 %v627, %v623
    %v844 = vpack.c.b16 %v628, %v624
    %v845 = vpack.c.b16 %v633, %v629
    %v846 = vpack.c.b16 %v634, %v630
    %v847 = vpack.c.b16 %v635, %v631
    %v848 = vpack.c.b16 %v636, %v632
    %v849 = vpack.c.b16 %v641, %v637
    %v850 = vpack.c.b16 %v642, %v638
    %v851 = vpack.c.b16 %v643, %v639
    %v852 = vpack.c.b16 %v644, %v640
    %v853 = vpack.c.b16 %v649, %v645
    %v854 = vpack.c.b16 %v650, %v646
    %v855 = vpack.c.b16 %v651, %v647
    %v856 = vpack.c.b16 %v652, %v648
    %v857 = vpack.c.b16 %v657, %v653
    %v858 = vpack.c.b16 %v658, %v654
    %v859 = vpack.c.b16 %v659, %v655
    %v860 = vpack.c.b16 %v660, %v656
    %v861 = vpack.c.b16 %v665, %v661
    %v862 = vpack.c.b16 %v666, %v662
    %v863 = vpack.c.b16 %v667, %v663
    %v864 = vpack.c.b16 %v668, %v664
    %v865 = vpack.c.b16 %v673, %v669
    %v866 = vpack.c.b16 %v674, %v670
    %v867 = vpack.c.b16 %v675, %v671
    %v868 = vpack.c.b16 %v676, %v672
    %v869 = vpack.c.b16 %v681, %v677
    %v870 = vpack.c.b16 %v682, %v678
    %v871 = vpack.c.b16 %v683, %v679
    %v872 = vpack.c.b16 %v684, %v680
    %v873 = vpack.c.b16 %v689, %v685
    %v874 = vpack.c.b16 %v690, %v686
    %v875 = vpack.c.b16 %v691, %v687
    %v876 = vpack.c.b16 %v692, %v688
    %v877 = vpack.c.b16 %v697, %v693
    %v878 = vpack.c.b16 %v698, %v694
    %v879 = vpack.c.b16 %v699, %v695
    %v880 = vpack.c.b16 %v700, %v696
    %v881 = vpack.c.b16 %v705, %v701
    %v882 = vpack.c.b16 %v706, %v702
    %v883 = vpack.c.b16 %v707, %v703
    %v884 = vpack.c.b16 %v708, %v704
    %v885 = vpack.c.b16 %v713, %v709
    %v886 = vpack.c.b16 %v714, %v710
    %v887 = vpack.c.b16 %v715, %v711
    %v888 = vpack.c.b16 %v716, %v712
    %v889 = vpack.c.b16 %v721, %v717
    %v890 = vpack.c.b16 %v722, %v718
    %v891 = vpack.c.b16 %v723, %v719
    %v892 = vpack.c.b16 %v724, %v720
    %v893 = vpack.c.b16 %v729, %v725
    %v894 = vpack.c.b16 %v730, %v726
    %v895 = vpack.c.b16 %v731, %v727
    %v896 = vpack.c.b16 %v732, %v728
    %v897 = vpack.c.b16 %v737, %v733
    %v898 = vpack.c.b16 %v738, %v734
    %v899 = vpack.c.b16 %v739, %v735
    %v900 = vpack.c.b16 %v740, %v736
    %v901 = vpack.c.b16 %v745, %v741
    %v902 = vpack.c.b16 %v746, %v742
    %v903 = vpack.c.b16 %v747, %v743
    %v904 = vpack.c.b16 %v748, %v744
    %v905 = vpack.c.b16 %v753, %v749
    %v906 = vpack.c.b16 %v754, %v750
    %v907 = vpack.c.b16 %v755, %v751
    %v908 = vpack.c.b16 %v756, %v752
    %v909 = vpack.c.b16 %v761, %v757
    %v910 = vpack.c.b16 %v762, %v758
    %v911 = vpack.c.b16 %v763, %v759
    %v912 = vpack.c.b16 %v764, %v760
    %v913 = vpack.c.b16 %v769, %v765
    %v914 = vpack.c.b16 %v770, %v766
    %v915 = vpack.c.b16 %v771, %v767
    %v916 = vpack.c.b16 %v772, %v768
    %v917 = vpack.c.b16 %v777, %v773
    %v918 = vpack.c.b16 %v778, %v774
    %v919 = vpack.c.b16 %v779, %v775
    %v920 = vpack.c.b16 %v780, %v776
    %v921 = vpack.c.b16 %v785, %v781
    %v922 = vpack.c.b16 %v786, %v782
    %v923 = vpack.c.b16 %v787, %v783
    %v924 = vpack.c.b16 %v788, %v784
    %v925 = vpack.c.b16 %v793, %v789
    %v926 = vpack.c.b16 %v794, %v790
    %v927 = vpack.c.b16 %v795, %v791
    %v928 = vpack.c.b16 %v796, %v792
    %v929 = vpack.c.b16 %v801, %v797
    %v930 = vpack.c.b16 %v802, %v798
    %v931 = vpack.c.b16 %v803, %v799
    %v932 = vpack.c.b16 %v804, %v800
    %1061 = vmatprep.subr.bf16.mxu0 %v806
    %1062 = vmatpush1.bf16.msra.mxu0 %v805
    %1063 = vmatprep.subr.bf16.mxu0 %v810
    %1064 = vmatpush1.bf16.msra.mxu0 %v809
    %1065 = vmatprep.subr.bf16.mxu0 %v814
    %1066 = vmatpush1.bf16.msra.mxu0 %v813
    %1067 = vmatprep.subr.bf16.mxu0 %v818
    %1068 = vmatpush1.bf16.msra.mxu0 %v817
    %1069 = vmatprep.subr.bf16.mxu0 %v822
    %1070 = vmatpush1.bf16.msra.mxu0 %v821
    %1071 = vmatprep.subr.bf16.mxu0 %v826
    %1072 = vmatpush1.bf16.msra.mxu0 %v825
    %1073 = vmatprep.subr.bf16.mxu0 %v830
    %1074 = vmatpush1.bf16.msra.mxu0 %v829
    %1075 = vmatprep.subr.bf16.mxu0 %v834
    %1076 = vmatpush1.bf16.msra.mxu0 %v833
    %1077 = vmatprep.subr.bf16.mxu0 %v838
    %1078 = vmatpush1.bf16.msra.mxu0 %v837
    %1079 = vmatprep.subr.bf16.mxu0 %v842
    %1080 = vmatpush1.bf16.msra.mxu0 %v841
    %1081 = vmatprep.subr.bf16.mxu0 %v846
    %1082 = vmatpush1.bf16.msra.mxu0 %v845
    %1083 = vmatprep.subr.bf16.mxu0 %v850
    %1084 = vmatpush1.bf16.msra.mxu0 %v849
    %1085 = vmatprep.subr.bf16.mxu0 %v854
    %1086 = vmatpush1.bf16.msra.mxu0 %v853
    %1087 = vmatprep.subr.bf16.mxu0 %v858
    %1088 = vmatpush1.bf16.msra.mxu0 %v857
    %1089 = vmatprep.subr.bf16.mxu0 %v862
    %1090 = vmatpush1.bf16.msra.mxu0 %v861
    %1091 = vmatprep.subr.bf16.mxu0 %v866
    %1092 = vmatpush1.bf16.msra.mxu0 %v865
    %1093 = vmatprep.mubr.bf16.mxu0 %v268
    %1094 = vmatmul.mubr.bf16.gmra.mrb[0].mxu0 %v267
    %v1095 = vpop.f32.mrb[0].mxu0
    %v1096 = vadd.f32 %v404, %v1095
    %v1097 = vpop.f32.mrb[0].mxu0
    %v1098 = vadd.f32 %v408, %v1097
    %v1099 = vpop.f32.mrb[0].mxu0
    %v1100 = vpop.f32.mrb[0].mxu0
    %1101 = vdwg.mxu0
    %1102 = vmatprep.subr.bf16.mxu0 %v870
    %1103 = vmatpush1.bf16.msra.mxu0 %v869
    %1104 = vmatprep.subr.bf16.mxu0 %v874
    %1105 = vmatpush1.bf16.msra.mxu0 %v873
    %1106 = vmatprep.subr.bf16.mxu0 %v878
    %1107 = vmatpush1.bf16.msra.mxu0 %v877
    %1108 = vmatprep.subr.bf16.mxu0 %v882
    %1109 = vmatpush1.bf16.msra.mxu0 %v881
    %1110 = vmatprep.subr.bf16.mxu0 %v886
    %1111 = vmatpush1.bf16.msra.mxu0 %v885
    %1112 = vmatprep.subr.bf16.mxu0 %v890
    %1113 = vmatpush1.bf16.msra.mxu0 %v889
    %1114 = vmatprep.subr.bf16.mxu0 %v894
    %1115 = vmatpush1.bf16.msra.mxu0 %v893
    %1116 = vmatprep.subr.bf16.mxu0 %v898
    %1117 = vmatpush1.bf16.msra.mxu0 %v897
    %1118 = vmatprep.subr.bf16.mxu0 %v902
    %1119 = vmatpush1.bf16.msra.mxu0 %v901
    %1120 = vmatprep.subr.bf16.mxu0 %v906
    %1121 = vmatpush1.bf16.msra.mxu0 %v905
    %1122 = vmatprep.subr.bf16.mxu0 %v910
    %1123 = vmatpush1.bf16.msra.mxu0 %v909
    %1124 = vmatprep.subr.bf16.mxu0 %v914
    %1125 = vmatpush1.bf16.msra.mxu0 %v913
    %1126 = vmatprep.subr.bf16.mxu0 %v918
    %1127 = vmatpush1.bf16.msra.mxu0 %v917
    %1128 = vmatprep.subr.bf16.mxu0 %v922
    %1129 = vmatpush1.bf16.msra.mxu0 %v921
    %1130 = vmatprep.subr.bf16.mxu0 %v926
    %1131 = vmatpush1.bf16.msra.mxu0 %v925
    %1132 = vmatprep.subr.bf16.mxu0 %v930
    %1133 = vmatpush1.bf16.msra.mxu0 %v929
    %1134 = vmatprep.mubr.bf16.mxu0 %v270
    %1135 = vmatmul.mubr.bf16.gmra.mrb[0].mxu0 %v269
    %v1136 = vpop.f32.mrb[0].mxu0
    %v1137 = vadd.f32 %v1096, %v1136
    %v1138 = vpop.f32.mrb[0].mxu0
    %v1139 = vadd.f32 %v1098, %v1138
    %v1140 = vpop.f32.mrb[0].mxu0
    %v1141 = vpop.f32.mrb[0].mxu0
    %1142 = vdwg.mxu0
    %1143 = vmatprep.subr.bf16.mxu0 %v808
    %1144 = vmatpush1.bf16.msra.mxu0 %v807
    %1145 = vmatprep.subr.bf16.mxu0 %v812
    %1146 = vmatpush1.bf16.msra.mxu0 %v811
    %1147 = vmatprep.subr.bf16.mxu0 %v816
    %1148 = vmatpush1.bf16.msra.mxu0 %v815
    %1149 = vmatprep.subr.bf16.mxu0 %v820
    %1150 = vmatpush1.bf16.msra.mxu0 %v819
    %1151 = vmatprep.subr.bf16.mxu0 %v824
    %1152 = vmatpush1.bf16.msra.mxu0 %v823
    %1153 = vmatprep.subr.bf16.mxu0 %v828
    %1154 = vmatpush1.bf16.msra.mxu0 %v827
    %1155 = vmatprep.subr.bf16.mxu0 %v832
    %1156 = vmatpush1.bf16.msra.mxu0 %v831
    %1157 = vmatprep.subr.bf16.mxu0 %v836
    %1158 = vmatpush1.bf16.msra.mxu0 %v835
    %1159 = vmatprep.subr.bf16.mxu0 %v840
    %1160 = vmatpush1.bf16.msra.mxu0 %v839
    %1161 = vmatprep.subr.bf16.mxu0 %v844
    %1162 = vmatpush1.bf16.msra.mxu0 %v843
    %1163 = vmatprep.subr.bf16.mxu0 %v848
    %1164 = vmatpush1.bf16.msra.mxu0 %v847
    %1165 = vmatprep.subr.bf16.mxu0 %v852
    %1166 = vmatpush1.bf16.msra.mxu0 %v851
    %1167 = vmatprep.subr.bf16.mxu0 %v856
    %1168 = vmatpush1.bf16.msra.mxu0 %v855
    %1169 = vmatprep.subr.bf16.mxu0 %v860
    %1170 = vmatpush1.bf16.msra.mxu0 %v859
    %1171 = vmatprep.subr.bf16.mxu0 %v864
    %1172 = vmatpush1.bf16.msra.mxu0 %v863
    %1173 = vmatprep.subr.bf16.mxu0 %v868
    %1174 = vmatpush1.bf16.msra.mxu0 %v867
    %1175 = vmatprep.mubr.bf16.mxu0 %v268
    %1176 = vmatmul.mubr.bf16.gmra.mrb[0].mxu0 %v267
    %v1177 = vpop.f32.mrb[0].mxu0
    %v1178 = vadd.f32 %v412, %v1177
    %v1179 = vpop.f32.mrb[0].mxu0
    %v1180 = vadd.f32 %v416, %v1179
    %v1181 = vpop.f32.mrb[0].mxu0
    %v1182 = vpop.f32.mrb[0].mxu0
    %1183 = vdwg.mxu0
    %1184 = vmatprep.subr.bf16.mxu0 %v872
    %1185 = vmatpush1.bf16.msra.mxu0 %v871
    %1186 = vmatprep.subr.bf16.mxu0 %v876
    %1187 = vmatpush1.bf16.msra.mxu0 %v875
    %1188 = vmatprep.subr.bf16.mxu0 %v880
    %1189 = vmatpush1.bf16.msra.mxu0 %v879
    %1190 = vmatprep.subr.bf16.mxu0 %v884
    %1191 = vmatpush1.bf16.msra.mxu0 %v883
    %1192 = vmatprep.subr.bf16.mxu0 %v888
    %1193 = vmatpush1.bf16.msra.mxu0 %v887
    %1194 = vmatprep.subr.bf16.mxu0 %v892
    %1195 = vmatpush1.bf16.msra.mxu0 %v891
    %1196 = vmatprep.subr.bf16.mxu0 %v896
    %1197 = vmatpush1.bf16.msra.mxu0 %v895
    %1198 = vmatprep.subr.bf16.mxu0 %v900
    %1199 = vmatpush1.bf16.msra.mxu0 %v899
    %1200 = vmatprep.subr.bf16.mxu0 %v904
    %1201 = vmatpush1.bf16.msra.mxu0 %v903
    %1202 = vmatprep.subr.bf16.mxu0 %v908
    %1203 = vmatpush1.bf16.msra.mxu0 %v907
    %1204 = vmatprep.subr.bf16.mxu0 %v912
    %1205 = vmatpush1.bf16.msra.mxu0 %v911
    %1206 = vmatprep.subr.bf16.mxu0 %v916
    %1207 = vmatpush1.bf16.msra.mxu0 %v915
    %1208 = vmatprep.subr.bf16.mxu0 %v920
    %1209 = vmatpush1.bf16.msra.mxu0 %v919
    %1210 = vmatprep.subr.bf16.mxu0 %v924
    %1211 = vmatpush1.bf16.msra.mxu0 %v923
    %1212 = vmatprep.subr.bf16.mxu0 %v928
    %1213 = vmatpush1.bf16.msra.mxu0 %v927
    %1214 = vmatprep.subr.bf16.mxu0 %v932
    %1215 = vmatpush1.bf16.msra.mxu0 %v931
    %1216 = vmatprep.mubr.bf16.mxu0 %v270
    %1217 = vmatmul.mubr.bf16.gmra.mrb[0].mxu0 %v269
    %v1218 = vpop.f32.mrb[0].mxu0
    %v1219 = vadd.f32 %v1178, %v1218
    %v1220 = vpop.f32.mrb[0].mxu0
    %v1221 = vadd.f32 %v1180, %v1220
    %v1222 = vpop.f32.mrb[0].mxu0
    %v1223 = vpop.f32.mrb[0].mxu0
    %1224 = vdwg.mxu0
    %v1225 = vmax.f32 %v1137, 0.0
    %v1226 = vmax.f32 %v1139, 0.0
    %v1227 = vmax.f32 %v1219, 0.0
    %v1228 = vmax.f32 %v1221, 0.0
    %v1229 = vpack.c.bf16 %v1225, %v1225
    %v1230 = vpack.c.bf16 %v1226, %v1226
    %v1231 = vpack.c.bf16 %v1227, %v1227
    %v1232 = vpack.c.bf16 %v1228, %v1228
    %v1233 = vld [vmem:[#allocation8] sm:$0xf]
    %v1234 = vld [vmem:[#allocation8 + $0x4] sm:$0xf]
    %v1235 = vld [vmem:[#allocation8 + $0x8] sm:$0xf]
    %v1236 = vld [vmem:[#allocation8 + $0xc] sm:$0xf]
    %v1237 = vld [vmem:[#allocation8 + $0x10] sm:$0xf]
    %v1238 = vld [vmem:[#allocation8 + $0x14] sm:$0xf]
    %v1239 = vld [vmem:[#allocation8 + $0x18] sm:$0xf]
    %v1240 = vld [vmem:[#allocation8 + $0x1c] sm:$0xf]
    %v1241 = vld [vmem:[#allocation8 + $0x20] sm:$0xf]
    %v1242 = vld [vmem:[#allocation8 + $0x24] sm:$0xf]
    %v1243 = vld [vmem:[#allocation8 + $0x28] sm:$0xf]
    %v1244 = vld [vmem:[#allocation8 + $0x2c] sm:$0xf]
    %v1245 = vld [vmem:[#allocation8 + $0x30] sm:$0xf]
    %v1246 = vld [vmem:[#allocation8 + $0x34] sm:$0xf]
    %v1247 = vld [vmem:[#allocation8 + $0x38] sm:$0xf]
    %v1248 = vld [vmem:[#allocation8 + $0x3c] sm:$0xf]
    %v1249 = vld [vmem:[#allocation8 + $0x40] sm:$0xf]
    %v1250 = vld [vmem:[#allocation8 + $0x44] sm:$0xf]
    %v1251 = vld [vmem:[#allocation8 + $0x48] sm:$0xf]
    %v1252 = vld [vmem:[#allocation8 + $0x4c] sm:$0xf]
    %v1253 = vld [vmem:[#allocation8 + $0x50] sm:$0xf]
    %v1254 = vld [vmem:[#allocation8 + $0x54] sm:$0xf]
    %v1255 = vld [vmem:[#allocation8 + $0x58] sm:$0xf]
    %v1256 = vld [vmem:[#allocation8 + $0x5c] sm:$0xf]
    %v1257 = vld [vmem:[#allocation8 + $0x60] sm:$0xf]
    %v1258 = vld [vmem:[#allocation8 + $0x64] sm:$0xf]
    %v1259 = vld [vmem:[#allocation8 + $0x68] sm:$0xf]
    %v1260 = vld [vmem:[#allocation8 + $0x6c] sm:$0xf]
    %v1261 = vld [vmem:[#allocation8 + $0x70] sm:$0xf]
    %v1262 = vld [vmem:[#allocation8 + $0x74] sm:$0xf]
    %v1263 = vld [vmem:[#allocation8 + $0x78] sm:$0xf]
    %v1264 = vld [vmem:[#allocation8 + $0x7c] sm:$0xf]
    %v1265 = vld [vmem:[#allocation8 + $0x80] sm:$0xf]
    %v1266 = vld [vmem:[#allocation8 + $0x84] sm:$0xf]
    %v1267 = vld [vmem:[#allocation8 + $0x88] sm:$0xf]
    %v1268 = vld [vmem:[#allocation8 + $0x8c] sm:$0xf]
    %v1269 = vld [vmem:[#allocation8 + $0x90] sm:$0xf]
    %v1270 = vld [vmem:[#allocation8 + $0x94] sm:$0xf]
    %v1271 = vld [vmem:[#allocation8 + $0x98] sm:$0xf]
    %v1272 = vld [vmem:[#allocation8 + $0x9c] sm:$0xf]
    %v1273 = vld [vmem:[#allocation8 + $0xa0] sm:$0xf]
    %v1274 = vld [vmem:[#allocation8 + $0xa4] sm:$0xf]
    %v1275 = vld [vmem:[#allocation8 + $0xa8] sm:$0xf]
    %v1276 = vld [vmem:[#allocation8 + $0xac] sm:$0xf]
    %v1277 = vld [vmem:[#allocation8 + $0xb0] sm:$0xf]
    %v1278 = vld [vmem:[#allocation8 + $0xb4] sm:$0xf]
    %v1279 = vld [vmem:[#allocation8 + $0xb8] sm:$0xf]
    %v1280 = vld [vmem:[#allocation8 + $0xbc] sm:$0xf]
    %v1281 = vld [vmem:[#allocation8 + $0xc0] sm:$0xf]
    %v1282 = vld [vmem:[#allocation8 + $0xc4] sm:$0xf]
    %v1283 = vld [vmem:[#allocation8 + $0xc8] sm:$0xf]
    %v1284 = vld [vmem:[#allocation8 + $0xcc] sm:$0xf]
    %v1285 = vld [vmem:[#allocation8 + $0xd0] sm:$0xf]
    %v1286 = vld [vmem:[#allocation8 + $0xd4] sm:$0xf]
    %v1287 = vld [vmem:[#allocation8 + $0xd8] sm:$0xf]
    %v1288 = vld [vmem:[#allocation8 + $0xdc] sm:$0xf]
    %v1289 = vld [vmem:[#allocation8 + $0xe0] sm:$0xf]
    %v1290 = vld [vmem:[#allocation8 + $0xe4] sm:$0xf]
    %v1291 = vld [vmem:[#allocation8 + $0xe8] sm:$0xf]
    %v1292 = vld [vmem:[#allocation8 + $0xec] sm:$0xf]
    %v1293 = vld [vmem:[#allocation8 + $0xf0] sm:$0xf]
    %v1294 = vld [vmem:[#allocation8 + $0xf4] sm:$0xf]
    %v1295 = vld [vmem:[#allocation8 + $0xf8] sm:$0xf]
    %v1296 = vld [vmem:[#allocation8 + $0xfc] sm:$0xf]
    %v1297 = vld [vmem:[%s6] sm:$0x1]
    %v1299 = vlaneseq
    %v1300 = vshrl.u32 %v1299, 7
    %v1301 = vsub.s32 0, %v1300
    %v1302 = vrot.slane %v1297, %v1301
    %v1368 = vunpack.c.l.b16 %v1233
    %v1369 = vunpack.c.l.b16 %v1234
    %v1370 = vunpack.c.l.b16 %v1235
    %v1371 = vunpack.c.l.b16 %v1236
    %v1372 = vunpack.c.l.b16 %v1237
    %v1373 = vunpack.c.l.b16 %v1238
    %v1374 = vunpack.c.l.b16 %v1239
    %v1375 = vunpack.c.l.b16 %v1240
    %v1376 = vunpack.c.l.b16 %v1241
    %v1377 = vunpack.c.l.b16 %v1242
    %v1378 = vunpack.c.l.b16 %v1243
    %v1379 = vunpack.c.l.b16 %v1244
    %v1380 = vunpack.c.l.b16 %v1245
    %v1381 = vunpack.c.l.b16 %v1246
    %v1382 = vunpack.c.l.b16 %v1247
    %v1383 = vunpack.c.l.b16 %v1248
    %v1384 = vunpack.c.l.b16 %v1249
    %v1385 = vunpack.c.l.b16 %v1250
    %v1386 = vunpack.c.l.b16 %v1251
    %v1387 = vunpack.c.l.b16 %v1252
    %v1388 = vunpack.c.l.b16 %v1253
    %v1389 = vunpack.c.l.b16 %v1254
    %v1390 = vunpack.c.l.b16 %v1255
    %v1391 = vunpack.c.l.b16 %v1256
    %v1392 = vunpack.c.l.b16 %v1257
    %v1393 = vunpack.c.l.b16 %v1258
    %v1394 = vunpack.c.l.b16 %v1259
    %v1395 = vunpack.c.l.b16 %v1260
    %v1396 = vunpack.c.l.b16 %v1261
    %v1397 = vunpack.c.l.b16 %v1262
    %v1398 = vunpack.c.l.b16 %v1263
    %v1399 = vunpack.c.l.b16 %v1264
    %v1400 = vunpack.c.l.b16 %v1265
    %v1401 = vunpack.c.l.b16 %v1266
    %v1402 = vunpack.c.l.b16 %v1267
    %v1403 = vunpack.c.l.b16 %v1268
    %v1404 = vunpack.c.l.b16 %v1269
    %v1405 = vunpack.c.l.b16 %v1270
    %v1406 = vunpack.c.l.b16 %v1271
    %v1407 = vunpack.c.l.b16 %v1272
    %v1408 = vunpack.c.l.b16 %v1273
    %v1409 = vunpack.c.l.b16 %v1274
    %v1410 = vunpack.c.l.b16 %v1275
    %v1411 = vunpack.c.l.b16 %v1276
    %v1412 = vunpack.c.l.b16 %v1277
    %v1413 = vunpack.c.l.b16 %v1278
    %v1414 = vunpack.c.l.b16 %v1279
    %v1415 = vunpack.c.l.b16 %v1280
    %v1416 = vunpack.c.l.b16 %v1281
    %v1417 = vunpack.c.l.b16 %v1282
    %v1418 = vunpack.c.l.b16 %v1283
    %v1419 = vunpack.c.l.b16 %v1284
    %v1420 = vunpack.c.l.b16 %v1285
    %v1421 = vunpack.c.l.b16 %v1286
    %v1422 = vunpack.c.l.b16 %v1287
    %v1423 = vunpack.c.l.b16 %v1288
    %v1424 = vunpack.c.l.b16 %v1289
    %v1425 = vunpack.c.l.b16 %v1290
    %v1426 = vunpack.c.l.b16 %v1291
    %v1427 = vunpack.c.l.b16 %v1292
    %v1428 = vunpack.c.l.b16 %v1293
    %v1429 = vunpack.c.l.b16 %v1294
    %v1430 = vunpack.c.l.b16 %v1295
    %v1431 = vunpack.c.l.b16 %v1296
    %v1432 = vpack.c.b16 %v1369, %v1368
    %v1433 = vpack.c.b16 %v1371, %v1370
    %v1434 = vpack.c.b16 %v1373, %v1372
    %v1435 = vpack.c.b16 %v1375, %v1374
    %v1436 = vpack.c.b16 %v1377, %v1376
    %v1437 = vpack.c.b16 %v1379, %v1378
    %v1438 = vpack.c.b16 %v1381, %v1380
    %v1439 = vpack.c.b16 %v1383, %v1382
    %v1440 = vpack.c.b16 %v1385, %v1384
    %v1441 = vpack.c.b16 %v1387, %v1386
    %v1442 = vpack.c.b16 %v1389, %v1388
    %v1443 = vpack.c.b16 %v1391, %v1390
    %v1444 = vpack.c.b16 %v1393, %v1392
    %v1445 = vpack.c.b16 %v1395, %v1394
    %v1446 = vpack.c.b16 %v1397, %v1396
    %v1447 = vpack.c.b16 %v1399, %v1398
    %v1448 = vpack.c.b16 %v1401, %v1400
    %v1449 = vpack.c.b16 %v1403, %v1402
    %v1450 = vpack.c.b16 %v1405, %v1404
    %v1451 = vpack.c.b16 %v1407, %v1406
    %v1452 = vpack.c.b16 %v1409, %v1408
    %v1453 = vpack.c.b16 %v1411, %v1410
    %v1454 = vpack.c.b16 %v1413, %v1412
    %v1455 = vpack.c.b16 %v1415, %v1414
    %v1456 = vpack.c.b16 %v1417, %v1416
    %v1457 = vpack.c.b16 %v1419, %v1418
    %v1458 = vpack.c.b16 %v1421, %v1420
    %v1459 = vpack.c.b16 %v1423, %v1422
    %v1460 = vpack.c.b16 %v1425, %v1424
    %v1461 = vpack.c.b16 %v1427, %v1426
    %v1462 = vpack.c.b16 %v1429, %v1428
    %v1463 = vpack.c.b16 %v1431, %v1430
    %1496 = vmatprep.subr.bf16.mxu0 0
    %1497 = vmatpush1.bf16.msra.mxu0 %v1432
    %1498 = vmatprep.subr.bf16.mxu0 0
    %1499 = vmatpush1.bf16.msra.mxu0 %v1433
    %1500 = vmatprep.subr.bf16.mxu0 0
    %1501 = vmatpush1.bf16.msra.mxu0 %v1434
    %1502 = vmatprep.subr.bf16.mxu0 0
    %1503 = vmatpush1.bf16.msra.mxu0 %v1435
    %1504 = vmatprep.subr.bf16.mxu0 0
    %1505 = vmatpush1.bf16.msra.mxu0 %v1436
    %1506 = vmatprep.subr.bf16.mxu0 0
    %1507 = vmatpush1.bf16.msra.mxu0 %v1437
    %1508 = vmatprep.subr.bf16.mxu0 0
    %1509 = vmatpush1.bf16.msra.mxu0 %v1438
    %1510 = vmatprep.subr.bf16.mxu0 0
    %1511 = vmatpush1.bf16.msra.mxu0 %v1439
    %1512 = vmatprep.subr.bf16.mxu0 0
    %1513 = vmatpush1.bf16.msra.mxu0 %v1440
    %1514 = vmatprep.subr.bf16.mxu0 0
    %1515 = vmatpush1.bf16.msra.mxu0 %v1441
    %1516 = vmatprep.subr.bf16.mxu0 0
    %1517 = vmatpush1.bf16.msra.mxu0 %v1442
    %1518 = vmatprep.subr.bf16.mxu0 0
    %1519 = vmatpush1.bf16.msra.mxu0 %v1443
    %1520 = vmatprep.subr.bf16.mxu0 0
    %1521 = vmatpush1.bf16.msra.mxu0 %v1444
    %1522 = vmatprep.subr.bf16.mxu0 0
    %1523 = vmatpush1.bf16.msra.mxu0 %v1445
    %1524 = vmatprep.subr.bf16.mxu0 0
    %1525 = vmatpush1.bf16.msra.mxu0 %v1446
    %1526 = vmatprep.subr.bf16.mxu0 0
    %1527 = vmatpush1.bf16.msra.mxu0 %v1447
    %1528 = vmatprep.mubr.bf16.mxu0 %v1230
    %1529 = vmatmul.mubr.bf16.gmra.mrb[0].mxu0 %v1229
    %v1530 = vpop.f32.mrb[0].mxu0
    %v1531 = vadd.f32 %v1302, %v1530
    %v1532 = vpop.f32.mrb[0].mxu0
    %v1533 = vpop.f32.mrb[0].mxu0
    %v1534 = vpop.f32.mrb[0].mxu0
    %1535 = vdwg.mxu0
    %1536 = vmatprep.subr.bf16.mxu0 0
    %1537 = vmatpush1.bf16.msra.mxu0 %v1448
    %1538 = vmatprep.subr.bf16.mxu0 0
    %1539 = vmatpush1.bf16.msra.mxu0 %v1449
    %1540 = vmatprep.subr.bf16.mxu0 0
    %1541 = vmatpush1.bf16.msra.mxu0 %v1450
    %1542 = vmatprep.subr.bf16.mxu0 0
    %1543 = vmatpush1.bf16.msra.mxu0 %v1451
    %1544 = vmatprep.subr.bf16.mxu0 0
    %1545 = vmatpush1.bf16.msra.mxu0 %v1452
    %1546 = vmatprep.subr.bf16.mxu0 0
    %1547 = vmatpush1.bf16.msra.mxu0 %v1453
    %1548 = vmatprep.subr.bf16.mxu0 0
    %1549 = vmatpush1.bf16.msra.mxu0 %v1454
    %1550 = vmatprep.subr.bf16.mxu0 0
    %1551 = vmatpush1.bf16.msra.mxu0 %v1455
    %1552 = vmatprep.subr.bf16.mxu0 0
    %1553 = vmatpush1.bf16.msra.mxu0 %v1456
    %1554 = vmatprep.subr.bf16.mxu0 0
    %1555 = vmatpush1.bf16.msra.mxu0 %v1457
    %1556 = vmatprep.subr.bf16.mxu0 0
    %1557 = vmatpush1.bf16.msra.mxu0 %v1458
    %1558 = vmatprep.subr.bf16.mxu0 0
    %1559 = vmatpush1.bf16.msra.mxu0 %v1459
    %1560 = vmatprep.subr.bf16.mxu0 0
    %1561 = vmatpush1.bf16.msra.mxu0 %v1460
    %1562 = vmatprep.subr.bf16.mxu0 0
    %1563 = vmatpush1.bf16.msra.mxu0 %v1461
    %1564 = vmatprep.subr.bf16.mxu0 0
    %1565 = vmatpush1.bf16.msra.mxu0 %v1462
    %1566 = vmatprep.subr.bf16.mxu0 0
    %1567 = vmatpush1.bf16.msra.mxu0 %v1463
    %1568 = vmatprep.mubr.bf16.mxu0 %v1232
    %1569 = vmatmul.mubr.bf16.gmra.mrb[0].mxu0 %v1231
    %v1570 = vpop.f32.mrb[0].mxu0
    %v1571 = vadd.f32 %v1531, %v1570
    %v1572 = vpop.f32.mrb[0].mxu0
    %v1573 = vpop.f32.mrb[0].mxu0
    %v1574 = vpop.f32.mrb[0].mxu0
    %1575 = vdwg.mxu0
    %v1576 = vpack.c.bf16 %v1571, %v1571
    %1577 = vst [vmem:[#allocation10] sm:$0xf] %v1576
    // Predicated region
    $region46: #{qnetwork_forward.1} parent=1 // pred_check
      _
    $region47: #{qnetwork_forward.1} parent=1 // pred_check_branch
      %1579 = sbr.rel (0) target = $region49
    $region48: #{qnetwork_forward.1} parent=1 // pred_region
      %s1581 = ssub.s32 64, 64
      %1582 = vsyncadd [#allocation4], %s1581
      %s1584 = sshll.u32 [#allocation10], 4
      %s1585 = int_to_ptr.vmem [resolvable:$true] %s1584
      %1587 = dma.vmem_to_hbm [thread:$0]  %s1585, 64, %s7, [#allocation4]
    $region49: #{qnetwork_forward.1} parent=1 // pred_fallthru
      _
    // Predicated region
    $region50: #{qnetwork_forward.1} parent=1 // pred_check
      _
    $region51: #{qnetwork_forward.1} parent=1 // pred_check_branch
      %1589 = sbr.rel (0) target = $region53
    $region52: #{qnetwork_forward.1} parent=1 // pred_region
      %1590 = dma.done [#allocation4], 64
    $region53: #{qnetwork_forward.1} parent=1 // pred_fallthru
      _
    %1591 = vsyncpa [#allocation3], 1
    %1592 = vsyncpa [#allocation6], 1
    %1593 = vsyncpa [#allocation9], 1
    %1594 = vsyncpa [#allocation4], 1

</llo_original>
